<compile_context>
chip_gen: v7x
topology: tpu7x:2x2x1
jax: 0.10.0
libtpu: 0.0.40
codegen_flags: <defaults>
</compile_context>

<pallas_src>
import functools

import jax
import jax.numpy as jnp
from jax.experimental import pallas as pl
from jax.experimental.pallas import tpu as pltpu


# ----------------------------------------------------------------------------
# Fused attention kernel
# ----------------------------------------------------------------------------
def _attention_kernel(x_ref, wq_ref, wk_ref, wv_ref, bq_ref, bk_ref, bv_ref,
                      o_ref, kT_scr, v_scr, *, tq, scale):
    """One (batch, query-tile) grid step.

    x_ref  : (1, C, S)   tokens, channels on sublanes, spatial on lanes
    w*_ref : (C, C)      PyTorch nn.Linear weight layout (out_feat, in_feat)
    b*_ref : (C, 1)      biases, broadcast along the lane (spatial) axis
    o_ref  : (1, C, TQ)  output tile in channels-major layout (lane-dense)
    kT_scr : (C, S)      K^T, persists across the query tiles of one batch
    v_scr  : (S, C)      V,   persists across the query tiles of one batch
    """
    qi = pl.program_id(1)

    # ---- K / V for this batch: computed once, kept resident in VMEM. ----
    @pl.when(qi == 0)
    def _():
        x_full = x_ref[0]                                           # (C, S)
        kT_scr[...] = (
            jnp.dot(wk_ref[...], x_full, preferred_element_type=jnp.float32)
            + bk_ref[...])                                          # (C, S)
        vT = (jnp.dot(wv_ref[...], x_full, preferred_element_type=jnp.float32)
              + bv_ref[...])                                        # (C, S)
        v_scr[...] = vT.T                                           # (S, C)

    # ---- Q for this query tile. ----
    start = pl.multiple_of(qi * tq, tq)
    xq = x_ref[0, :, pl.ds(start, tq)]                              # (C, TQ)
    qT = (jnp.dot(wq_ref[...], xq, preferred_element_type=jnp.float32)
          + bq_ref[...])                                            # (C, TQ)
    q = qT.T                                                        # (TQ, C)

    # ---- Scores + row softmax (reductions over the lane axis S). ----
    s = jnp.dot(q, kT_scr[...], preferred_element_type=jnp.float32) * scale
    m = jnp.max(s, axis=-1, keepdims=True)                          # (TQ, 1)
    p = jnp.exp(s - m)
    l = jnp.sum(p, axis=-1, keepdims=True)
    p = p / l                                                       # (TQ, S)

    # ---- Context: (TQ, S) @ (S, C) -> (TQ, C); store lane-dense as (C, TQ).
    out = jnp.dot(p, v_scr[...], preferred_element_type=jnp.float32)
    o_ref[0] = out.T.astype(o_ref.dtype)                            # (C, TQ)


# ----------------------------------------------------------------------------
# Wrapper
# ----------------------------------------------------------------------------
def _pick_query_tile(S):
    # Biggest MXU-friendly tile that divides S; bounds per-step score memory
    # to TQ*S floats (keeps v7x's 64 MiB VMEM safe for large images).
    for cand in (512, 256, 128):
        if S % cand == 0:
            return cand
    return S


def attention_layer(x_nchw, params, *, tq=None):
    """x_nchw: (B, C, H, W) float32.  Returns (B, C, H, W) float32."""
    B, C, H, W = x_nchw.shape
    S = H * W
    if tq is None:
        tq = _pick_query_tile(S)
    assert S % tq == 0, (S, tq)

    # Free reshape: NCHW already has spatial contiguous on the last axes.
    x_cs = x_nchw.reshape(B, C, S).astype(jnp.float32)
    scale = 1.0 / float(C) ** 0.5

    wq, bq = params["wq"], params["bq"].reshape(C, 1)
    wk, bk = params["wk"], params["bk"].reshape(C, 1)
    wv, bv = params["wv"], params["bv"].reshape(C, 1)

    kernel = functools.partial(_attention_kernel, tq=tq, scale=scale)
    out_cs = pl.pallas_call(
        kernel,
        out_shape=jax.ShapeDtypeStruct((B, C, S), jnp.float32),
        grid_spec=pltpu.PrefetchScalarGridSpec(
            num_scalar_prefetch=0,
            grid=(B, S // tq),
            in_specs=[
                pl.BlockSpec((1, C, S), lambda b, q: (b, 0, 0)),   # x (per batch)
                pl.BlockSpec((C, C), lambda b, q: (0, 0)),         # Wq
                pl.BlockSpec((C, C), lambda b, q: (0, 0)),         # Wk
                pl.BlockSpec((C, C), lambda b, q: (0, 0)),         # Wv
                pl.BlockSpec((C, 1), lambda b, q: (0, 0)),         # bq
                pl.BlockSpec((C, 1), lambda b, q: (0, 0)),         # bk
                pl.BlockSpec((C, 1), lambda b, q: (0, 0)),         # bv
            ],
            out_specs=pl.BlockSpec((1, C, tq), lambda b, q: (b, 0, q)),
            scratch_shapes=[
                pltpu.VMEM((C, S), jnp.float32),   # K^T
                pltpu.VMEM((S, C), jnp.float32),   # V
            ],
        ),
        compiler_params=pltpu.CompilerParams(
            dimension_semantics=("parallel", "arbitrary")),
    )(x_cs, wq, wk, wv, bq, bk, bv)

    return out_cs.reshape(B, C, H, W)


# ----------------------------------------------------------------------------
# Deterministic params + pure-JAX reference (for a correctness sanity check)
# ----------------------------------------------------------------------------
def init_attention_params(key, input_dim):
    ks = jax.random.split(key, 6)
    lim = 1.0 / float(input_dim) ** 0.5

    def u(k, shape):
        return jax.random.uniform(k, shape, jnp.float32, -lim, lim)

    return {
        "wq": u(ks[0], (input_dim, input_dim)), "bq": u(ks[1], (input_dim,)),
        "wk": u(ks[2], (input_dim, input_dim)), "bk": u(ks[3], (input_dim,)),
        "wv": u(ks[4], (input_dim, input_dim)), "bv": u(ks[5], (input_dim,)),
    }


def attention_reference(x_nchw, params):
    B, C, H, W = x_nchw.shape
    xt = jnp.transpose(x_nchw.reshape(B, C, H * W), (0, 2, 1))      # (B, S, C)
    q = xt @ params["wq"].T + params["bq"]
    k = xt @ params["wk"].T + params["bk"]
    v = xt @ params["wv"].T + params["bv"]
    a = jax.nn.softmax((q @ jnp.transpose(k, (0, 2, 1))) / float(C) ** 0.5,
                       axis=-1)
    o = a @ v
    return jnp.transpose(o, (0, 2, 1)).reshape(B, C, H, W)


if __name__ == "__main__":
    key = jax.random.PRNGKey(0)
    k_x, k_p = jax.random.split(key)

    # input_dim = C = 32, spatial 16x16 -> sequence length S = 256.
    B, C, H, W = 2, 32, 16, 16
    x = jax.random.normal(k_x, (B, C, H, W), jnp.float32)
    params = init_attention_params(k_p, C)

    # tq=128 -> grid (B, 2): exercises the per-batch K/V scratch reuse path.
    fwd = jax.jit(functools.partial(attention_layer, tq=128))
    out = fwd(x, params)
    jax.block_until_ready(out)

    assert out.shape == (B, C, H, W), out.shape
    assert bool(jnp.all(jnp.isfinite(out)))

    ref = attention_reference(x, params)
    max_err = float(jnp.max(jnp.abs(out - ref)))
    assert bool(jnp.allclose(out, ref, rtol=2e-2, atol=2e-2)), max_err

    print("KERNEL_OK")
</pallas_src>

<mosaic_0001>
module attributes {stable_mosaic.version = 11 : i64} {
  func.func @_attention_kernel(%arg0: i32, %arg1: i32, %arg2: memref<1x32x256xf32, #tpu.memory_space<vmem>>, %arg3: memref<32x32xf32, #tpu.memory_space<vmem>>, %arg4: memref<32x32xf32, #tpu.memory_space<vmem>>, %arg5: memref<32x32xf32, #tpu.memory_space<vmem>>, %arg6: memref<32x1xf32, #tpu.memory_space<vmem>>, %arg7: memref<32x1xf32, #tpu.memory_space<vmem>>, %arg8: memref<32x1xf32, #tpu.memory_space<vmem>>, %arg9: memref<1x32x128xf32, #tpu.memory_space<vmem>>, %arg10: memref<32x256xf32, #tpu.memory_space<vmem>>, %arg11: memref<256x32xf32, #tpu.memory_space<vmem>>) attributes {dimension_semantics = [#tpu.dimension_semantics<parallel>, #tpu.dimension_semantics<arbitrary>], iteration_bounds = array<i64: 2, 2>, scalar_prefetch = 0 : i64, scratch_operands = 2 : i64, tpu.core_type = #tpu.core_type<tc>, window_params = [{transform_indices = @transform_0, window_bounds = array<i64: 1, 32, 256>}, {pipeline_mode = #tpu.pipeline_mode<synchronous>, transform_indices = @transform_1, window_bounds = array<i64: 32, 32>}, {pipeline_mode = #tpu.pipeline_mode<synchronous>, transform_indices = @transform_2, window_bounds = array<i64: 32, 32>}, {pipeline_mode = #tpu.pipeline_mode<synchronous>, transform_indices = @transform_3, window_bounds = array<i64: 32, 32>}, {pipeline_mode = #tpu.pipeline_mode<synchronous>, transform_indices = @transform_4, window_bounds = array<i64: 32, 1>}, {pipeline_mode = #tpu.pipeline_mode<synchronous>, transform_indices = @transform_5, window_bounds = array<i64: 32, 1>}, {pipeline_mode = #tpu.pipeline_mode<synchronous>, transform_indices = @transform_6, window_bounds = array<i64: 32, 1>}, {transform_indices = @transform_7, window_bounds = array<i64: 1, 32, 128>}]} {
    %c0_i32 = arith.constant 0 : i32
    %0 = arith.cmpi eq, %arg1, %c0_i32 : i32
    %1 = arith.extui %0 : i1 to i32
    %c0_i32_0 = arith.constant 0 : i32
    %2 = arith.cmpi ne, %1, %c0_i32_0 : i32
    scf.if %2 {
      %c0_18 = arith.constant 0 : index
      %c0_19 = arith.constant 0 : index
      %c0_20 = arith.constant 0 : index
      %33 = vector.load %arg2[%c0_18, %c0_19, %c0_20] : memref<1x32x256xf32, #tpu.memory_space<vmem>>, vector<1x32x256xf32>
      %34 = vector.shape_cast %33 : vector<1x32x256xf32> to vector<32x256xf32>
      %c0_21 = arith.constant 0 : index
      %c0_22 = arith.constant 0 : index
      %35 = vector.load %arg4[%c0_21, %c0_22] : memref<32x32xf32, #tpu.memory_space<vmem>>, vector<32x32xf32>
      %cst_23 = arith.constant dense<0.000000e+00> : vector<32x256xf32>
      %36 = tpu.matmul %35, %34, %cst_23 {dimension_numbers = #tpu.dot_dimension_numbers<[1], [0], [0], [1], [0, 0, 1, 1], [], []>} : vector<32x32xf32>, vector<32x256xf32>, vector<32x256xf32> -> vector<32x256xf32>
      %c0_24 = arith.constant 0 : index
      %c0_25 = arith.constant 0 : index
      %37 = vector.load %arg7[%c0_24, %c0_25] : memref<32x1xf32, #tpu.memory_space<vmem>>, vector<32x1xf32>
      %38 = vector.broadcast %37 : vector<32x1xf32> to vector<32x256xf32>
      %39 = arith.addf %36, %38 : vector<32x256xf32>
      %c0_26 = arith.constant 0 : index
      %c0_27 = arith.constant 0 : index
      %40 = vector.load %arg10[%c0_26, %c0_27] : memref<32x256xf32, #tpu.memory_space<vmem>>, vector<32x256xf32>
      tpu.vector_store %arg10[%c0_26, %c0_27], %39 {strides = array<i32>} : memref<32x256xf32, #tpu.memory_space<vmem>>, vector<32x256xf32>,
      %c0_28 = arith.constant 0 : index
      %c0_29 = arith.constant 0 : index
      %41 = vector.load %arg5[%c0_28, %c0_29] : memref<32x32xf32, #tpu.memory_space<vmem>>, vector<32x32xf32>
      %cst_30 = arith.constant dense<0.000000e+00> : vector<32x256xf32>
      %42 = tpu.matmul %41, %34, %cst_30 {dimension_numbers = #tpu.dot_dimension_numbers<[1], [0], [0], [1], [0, 0, 1, 1], [], []>} : vector<32x32xf32>, vector<32x256xf32>, vector<32x256xf32> -> vector<32x256xf32>
      %c0_31 = arith.constant 0 : index
      %c0_32 = arith.constant 0 : index
      %43 = vector.load %arg8[%c0_31, %c0_32] : memref<32x1xf32, #tpu.memory_space<vmem>>, vector<32x1xf32>
      %44 = vector.broadcast %43 : vector<32x1xf32> to vector<32x256xf32>
      %45 = arith.addf %42, %44 : vector<32x256xf32>
      %46 = tpu.transpose %45, [1, 0] : vector<32x256xf32> -> vector<256x32xf32>
      %c0_33 = arith.constant 0 : index
      %c0_34 = arith.constant 0 : index
      %47 = vector.load %arg11[%c0_33, %c0_34] : memref<256x32xf32, #tpu.memory_space<vmem>>, vector<256x32xf32>
      tpu.vector_store %arg11[%c0_33, %c0_34], %46 {strides = array<i32>} : memref<256x32xf32, #tpu.memory_space<vmem>>, vector<256x32xf32>,
    } else {
    }
    %c128_i32 = arith.constant 128 : i32
    %3 = arith.muli %arg1, %c128_i32 : i32
    %4 = tpu.assume_multiple %3, 128 : i32
    %c0 = arith.constant 0 : index
    %c0_1 = arith.constant 0 : index
    %5 = arith.index_cast %4 : i32 to index
    %6 = vector.load %arg2[%c0, %c0_1, %5] : memref<1x32x256xf32, #tpu.memory_space<vmem>>, vector<1x32x128xf32>
    %7 = vector.shape_cast %6 : vector<1x32x128xf32> to vector<32x128xf32>
    %c0_2 = arith.constant 0 : index
    %c0_3 = arith.constant 0 : index
    %8 = vector.load %arg3[%c0_2, %c0_3] : memref<32x32xf32, #tpu.memory_space<vmem>>, vector<32x32xf32>
    %cst = arith.constant dense<0.000000e+00> : vector<32x128xf32>
    %9 = tpu.matmul %8, %7, %cst {dimension_numbers = #tpu.dot_dimension_numbers<[1], [0], [0], [1], [0, 0, 1, 1], [], []>} : vector<32x32xf32>, vector<32x128xf32>, vector<32x128xf32> -> vector<32x128xf32>
    %c0_4 = arith.constant 0 : index
    %c0_5 = arith.constant 0 : index
    %10 = vector.load %arg6[%c0_4, %c0_5] : memref<32x1xf32, #tpu.memory_space<vmem>>, vector<32x1xf32>
    %11 = vector.broadcast %10 : vector<32x1xf32> to vector<32x128xf32>
    %12 = arith.addf %9, %11 : vector<32x128xf32>
    %13 = tpu.transpose %12, [1, 0] : vector<32x128xf32> -> vector<128x32xf32>
    %c0_6 = arith.constant 0 : index
    %c0_7 = arith.constant 0 : index
    %14 = vector.load %arg10[%c0_6, %c0_7] : memref<32x256xf32, #tpu.memory_space<vmem>>, vector<32x256xf32>
    %cst_8 = arith.constant dense<0.000000e+00> : vector<128x256xf32>
    %15 = tpu.matmul %13, %14, %cst_8 {dimension_numbers = #tpu.dot_dimension_numbers<[1], [0], [0], [1], [0, 0, 1, 1], [], []>} : vector<128x32xf32>, vector<32x256xf32>, vector<128x256xf32> -> vector<128x256xf32>
    %cst_9 = arith.constant 0.176776692 : f32
    %16 = vector.broadcast %cst_9 : f32 to vector<128x256xf32>
    %17 = arith.mulf %15, %16 : vector<128x256xf32>
    %cst_10 = arith.constant dense<0xFF800000> : vector<128xf32>
    %18 = vector.multi_reduction <maximumf>, %17, %cst_10 [1] : vector<128x256xf32> to vector<128xf32>
    %19 = vector.shape_cast %18 : vector<128xf32> to vector<128x1xf32>
    %20 = vector.broadcast %19 : vector<128x1xf32> to vector<128x256xf32>
    %21 = arith.subf %17, %20 : vector<128x256xf32>
    %22 = math.exp %21 : vector<128x256xf32>
    %cst_11 = arith.constant dense<0.000000e+00> : vector<128xf32>
    %23 = vector.multi_reduction <add>, %22, %cst_11 [1] : vector<128x256xf32> to vector<128xf32>
    %24 = vector.shape_cast %23 : vector<128xf32> to vector<128x1xf32>
    %25 = vector.broadcast %24 : vector<128x1xf32> to vector<128x256xf32>
    %26 = arith.divf %22, %25 : vector<128x256xf32>
    %c0_12 = arith.constant 0 : index
    %c0_13 = arith.constant 0 : index
    %27 = vector.load %arg11[%c0_12, %c0_13] : memref<256x32xf32, #tpu.memory_space<vmem>>, vector<256x32xf32>
    %cst_14 = arith.constant dense<0.000000e+00> : vector<128x32xf32>
    %28 = tpu.matmul %26, %27, %cst_14 {dimension_numbers = #tpu.dot_dimension_numbers<[1], [0], [0], [1], [0, 0, 1, 1], [], []>} : vector<128x256xf32>, vector<256x32xf32>, vector<128x32xf32> -> vector<128x32xf32>
    %29 = tpu.transpose %28, [1, 0] : vector<128x32xf32> -> vector<32x128xf32>
    %c0_15 = arith.constant 0 : index
    %c0_16 = arith.constant 0 : index
    %c0_17 = arith.constant 0 : index
    %30 = vector.load %arg9[%c0_15, %c0_16, %c0_17] : memref<1x32x128xf32, #tpu.memory_space<vmem>>, vector<1x32x128xf32>
    %31 = vector.shape_cast %30 : vector<1x32x128xf32> to vector<32x128xf32>
    %32 = vector.shape_cast %29 : vector<32x128xf32> to vector<1x32x128xf32>
    tpu.vector_store %arg9[%c0_15, %c0_16, %c0_17], %32 {strides = array<i32>} : memref<1x32x128xf32, #tpu.memory_space<vmem>>, vector<1x32x128xf32>,
    return
  }
  func.func @transform_0(%arg0: i32, %arg1: i32) -> (i32, i32, i32) {
    %c0_i32 = arith.constant 0 : i32
    %c0_i32_0 = arith.constant 0 : i32
    %c0_i32_1 = arith.constant 0 : i32
    return %arg0, %c0_i32, %c0_i32_0 : i32, i32, i32
  }
  func.func @transform_1(%arg0: i32, %arg1: i32) -> (i32, i32) {
    %c0_i32 = arith.constant 0 : i32
    %c0_i32_0 = arith.constant 0 : i32
    %c0_i32_1 = arith.constant 0 : i32
    return %c0_i32, %c0_i32_0 : i32, i32
  }
  func.func @transform_2(%arg0: i32, %arg1: i32) -> (i32, i32) {
    %c0_i32 = arith.constant 0 : i32
    %c0_i32_0 = arith.constant 0 : i32
    %c0_i32_1 = arith.constant 0 : i32
    return %c0_i32, %c0_i32_0 : i32, i32
  }
  func.func @transform_3(%arg0: i32, %arg1: i32) -> (i32, i32) {
    %c0_i32 = arith.constant 0 : i32
    %c0_i32_0 = arith.constant 0 : i32
    %c0_i32_1 = arith.constant 0 : i32
    return %c0_i32, %c0_i32_0 : i32, i32
  }
  func.func @transform_4(%arg0: i32, %arg1: i32) -> (i32, i32) {
    %c0_i32 = arith.constant 0 : i32
    %c0_i32_0 = arith.constant 0 : i32
    %c0_i32_1 = arith.constant 0 : i32
    return %c0_i32, %c0_i32_0 : i32, i32
  }
  func.func @transform_5(%arg0: i32, %arg1: i32) -> (i32, i32) {
    %c0_i32 = arith.constant 0 : i32
    %c0_i32_0 = arith.constant 0 : i32
    %c0_i32_1 = arith.constant 0 : i32
    return %c0_i32, %c0_i32_0 : i32, i32
  }
  func.func @transform_6(%arg0: i32, %arg1: i32) -> (i32, i32) {
    %c0_i32 = arith.constant 0 : i32
    %c0_i32_0 = arith.constant 0 : i32
    %c0_i32_1 = arith.constant 0 : i32
    return %c0_i32, %c0_i32_0 : i32, i32
  }
  func.func @transform_7(%arg0: i32, %arg1: i32) -> (i32, i32, i32) {
    %c0_i32 = arith.constant 0 : i32
    %c0_i32_0 = arith.constant 0 : i32
    return %arg0, %c0_i32, %arg1 : i32, i32, i32
  }
}

</mosaic_0001>

<llo_original>
// kernel: attention_layer.1
$region0: #{attention_layer.1}
  #allocation0 [shape = 'u32[]', space=smem, size = 0x4, offset = 0x4, fixed_abs, tag = 'smem constant byte address 0x4 - core index']
  #allocation1 [shape = 'u32[144,128]{1,0:T(1,128)}', space=vmem, size = 0x12000, scoped, tag = 'internal scratch']
  #allocation2 [shape = 'f32[32,256]{1,0:T(8,128)}', space=vmem, size = 0x8000, scoped, tag = 'scratch operand']
  #allocation3 [shape = 'f32[256,32]{1,0:T(8,128)}', space=vmem, size = 0x20000, scoped, tag = 'scratch operand']
  %s0 = inlined_call_operand.vmem [shape: f32[2,32,256], index: 0, kind: input, shape index: {}]
  %s1 = inlined_call_operand.vmem [shape: f32[32,32], index: 1, kind: input, shape index: {}]
  %s2 = inlined_call_operand.vmem [shape: f32[32,32], index: 2, kind: input, shape index: {}]
  %s3 = inlined_call_operand.vmem [shape: f32[32,32], index: 3, kind: input, shape index: {}]
  %s4 = inlined_call_operand.vmem [shape: f32[32,1], index: 4, kind: input, shape index: {}]
  %s5 = inlined_call_operand.vmem [shape: f32[32,1], index: 5, kind: input, shape index: {}]
  %s6 = inlined_call_operand.vmem [shape: f32[32,1], index: 6, kind: input, shape index: {}]
  %s7 = inlined_call_operand.vmem [shape: f32[2,32,256], index: 7, kind: output, shape index: {}]
  %s8 = sld [smem:[#allocation0]]
  $region99: #{attention_layer.1} parent=0
    _
  %s10 = ssub.s32 1, %s8
  %s11 = scalar_select 0, %s10, %s8
  $region1: #{attention_layer.1} parent=0
    #allocation4 [shape = 'u8[32768]{0}', space=vmem, size = 0x8000, scoped, tag = 'output window, operand 0']
    loop: start=0, step=1, limit=6
    $region2: #{attention_layer.1} parent=1 // loop_pre_header
      _
    $region3: #{attention_layer.1} parent=1 // loop_header
      %s13 = sphi 0, %s17
      %p14 = scmp.ge.s32.totalorder %s13, 6
      %s20 = sphi 0, %s32
      %s21 = sphi 0, %s28
      %s22 = sphi 0, %s20
      %s23 = sphi 0, %s21
      %s24 = sphi 0, %s22
      %s25 = sphi 0, %s23
      %s35 = sphi 0, %s37
      %s38 = sphi 0, %s35
      %s39 = sphi 0, %s38
      %s55 = sphi 0, %s39
      %s59 = sphi 0, %s59
      %s61 = sphi 0, %s59
      %s62 = sphi 0, %s61
      %s76 = sphi 0, %s62
      %s80 = sphi 0, %s80
      %s82 = sphi 0, %s80
      %s83 = sphi 0, %s82
      %s97 = sphi 0, %s83
      %s101 = sphi 0, %s101
      %s103 = sphi 0, %s101
      %s104 = sphi 0, %s103
      %s118 = sphi 0, %s104
      %s122 = sphi 0, %s122
      %s124 = sphi 0, %s122
      %s125 = sphi 0, %s124
      %s139 = sphi 0, %s125
      %s143 = sphi 0, %s143
      %s145 = sphi 0, %s143
      %s146 = sphi 0, %s145
      %s160 = sphi 0, %s146
      %s164 = sphi 0, %s164
      %s166 = sphi 0, %s164
      %s167 = sphi 0, %s166
      %s181 = sphi 0, %s167
      %s189 = sphi 0, %s191
      %s192 = sphi 0, %s189
      %s193 = sphi 0, %s192
      %s209 = sphi 0, %s193
    $region4: #{attention_layer.1} parent=1 // loop_header_branch
      %16 = sbr.rel (%p14) target = $region8
    $region5: #{attention_layer.1} parent=1 // loop_body
      %s18 = ssub.s32 %s13, 1
      %s19 = ssub.s32 %s13, 2
      %s26 = sadd.s32 1, %s21
      %p27 = scmp.ge.s32.totalorder %s26, 2
      %s28 = scalar_select %p27, 0, %s26
      %s29 = sadd.s32 1, %s20
      %s30 = scalar_select %p27, %s29, %s20
      %p31 = scmp.ge.s32.totalorder %s30, 2
      %s32 = scalar_select %p31, 0, %s30
      %s33 = ssub.s32 %s20, %s32
      %p34 = scmp.eq.s32.totalorder %s33, 0
      %s36 = sadd.s32 %s35, 1
      %s37 = scalar_select %p34, %s35, %s36
      %p40 = pneg %p34
      %p41 = scmp.eq.s32.totalorder %s13, 3
      %p42 = por %p40, %p41
      %p43 = scmp.ne.s32.totalorder %s35, %s38
      %p44 = scmp.eq.s32.totalorder %s13, 0
      %p45 = por %p43, %p44
      %p46 = scmp.ne.s32.totalorder %s35, %s38
      %p47 = scmp.eq.s32.totalorder %s18, 3
      %p48 = por %p46, %p47
      %p49 = scmp.ne.s32.totalorder %s38, %s39
      %p50 = scmp.eq.s32.totalorder %s18, 0
      %p51 = por %p49, %p50
      %p52 = scmp.ne.s32.totalorder %s38, %s39
      %p53 = scmp.eq.s32.totalorder %s19, 3
      %p54 = por %p52, %p53
      %p56 = scmp.ne.s32.totalorder %s39, %s55
      %p57 = scmp.eq.s32.totalorder %s19, 0
      %p58 = por %p56, %p57
      %s60 = sadd.s32 %s59, 1
      %p63 = scmp.eq.s32.totalorder %s13, 3
      %p64 = scmp.ne.s32.totalorder %s59, %s61
      %p65 = scmp.eq.s32.totalorder %s13, 0
      %p66 = por %p64, %p65
      %p67 = scmp.ne.s32.totalorder %s59, %s61
      %p68 = scmp.eq.s32.totalorder %s18, 3
      %p69 = por %p67, %p68
      %p70 = scmp.ne.s32.totalorder %s61, %s62
      %p71 = scmp.eq.s32.totalorder %s18, 0
      %p72 = por %p70, %p71
      %p73 = scmp.ne.s32.totalorder %s61, %s62
      %p74 = scmp.eq.s32.totalorder %s19, 3
      %p75 = por %p73, %p74
      %p77 = scmp.ne.s32.totalorder %s62, %s76
      %p78 = scmp.eq.s32.totalorder %s19, 0
      %p79 = por %p77, %p78
      %s81 = sadd.s32 %s80, 1
      %p84 = scmp.eq.s32.totalorder %s13, 3
      %p85 = scmp.ne.s32.totalorder %s80, %s82
      %p86 = scmp.eq.s32.totalorder %s13, 0
      %p87 = por %p85, %p86
      %p88 = scmp.ne.s32.totalorder %s80, %s82
      %p89 = scmp.eq.s32.totalorder %s18, 3
      %p90 = por %p88, %p89
      %p91 = scmp.ne.s32.totalorder %s82, %s83
      %p92 = scmp.eq.s32.totalorder %s18, 0
      %p93 = por %p91, %p92
      %p94 = scmp.ne.s32.totalorder %s82, %s83
      %p95 = scmp.eq.s32.totalorder %s19, 3
      %p96 = por %p94, %p95
      %p98 = scmp.ne.s32.totalorder %s83, %s97
      %p99 = scmp.eq.s32.totalorder %s19, 0
      %p100 = por %p98, %p99
      %s102 = sadd.s32 %s101, 1
      %p105 = scmp.eq.s32.totalorder %s13, 3
      %p106 = scmp.ne.s32.totalorder %s101, %s103
      %p107 = scmp.eq.s32.totalorder %s13, 0
      %p108 = por %p106, %p107
      %p109 = scmp.ne.s32.totalorder %s101, %s103
      %p110 = scmp.eq.s32.totalorder %s18, 3
      %p111 = por %p109, %p110
      %p112 = scmp.ne.s32.totalorder %s103, %s104
      %p113 = scmp.eq.s32.totalorder %s18, 0
      %p114 = por %p112, %p113
      %p115 = scmp.ne.s32.totalorder %s103, %s104
      %p116 = scmp.eq.s32.totalorder %s19, 3
      %p117 = por %p115, %p116
      %p119 = scmp.ne.s32.totalorder %s104, %s118
      %p120 = scmp.eq.s32.totalorder %s19, 0
      %p121 = por %p119, %p120
      %s123 = sadd.s32 %s122, 1
      %p126 = scmp.eq.s32.totalorder %s13, 3
      %p127 = scmp.ne.s32.totalorder %s122, %s124
      %p128 = scmp.eq.s32.totalorder %s13, 0
      %p129 = por %p127, %p128
      %p130 = scmp.ne.s32.totalorder %s122, %s124
      %p131 = scmp.eq.s32.totalorder %s18, 3
      %p132 = por %p130, %p131
      %p133 = scmp.ne.s32.totalorder %s124, %s125
      %p134 = scmp.eq.s32.totalorder %s18, 0
      %p135 = por %p133, %p134
      %p136 = scmp.ne.s32.totalorder %s124, %s125
      %p137 = scmp.eq.s32.totalorder %s19, 3
      %p138 = por %p136, %p137
      %p140 = scmp.ne.s32.totalorder %s125, %s139
      %p141 = scmp.eq.s32.totalorder %s19, 0
      %p142 = por %p140, %p141
      %s144 = sadd.s32 %s143, 1
      %p147 = scmp.eq.s32.totalorder %s13, 3
      %p148 = scmp.ne.s32.totalorder %s143, %s145
      %p149 = scmp.eq.s32.totalorder %s13, 0
      %p150 = por %p148, %p149
      %p151 = scmp.ne.s32.totalorder %s143, %s145
      %p152 = scmp.eq.s32.totalorder %s18, 3
      %p153 = por %p151, %p152
      %p154 = scmp.ne.s32.totalorder %s145, %s146
      %p155 = scmp.eq.s32.totalorder %s18, 0
      %p156 = por %p154, %p155
      %p157 = scmp.ne.s32.totalorder %s145, %s146
      %p158 = scmp.eq.s32.totalorder %s19, 3
      %p159 = por %p157, %p158
      %p161 = scmp.ne.s32.totalorder %s146, %s160
      %p162 = scmp.eq.s32.totalorder %s19, 0
      %p163 = por %p161, %p162
      %s165 = sadd.s32 %s164, 1
      %p168 = scmp.eq.s32.totalorder %s13, 3
      %p169 = scmp.ne.s32.totalorder %s164, %s166
      %p170 = scmp.eq.s32.totalorder %s13, 0
      %p171 = por %p169, %p170
      %p172 = scmp.ne.s32.totalorder %s164, %s166
      %p173 = scmp.eq.s32.totalorder %s18, 3
      %p174 = por %p172, %p173
      %p175 = scmp.ne.s32.totalorder %s166, %s167
      %p176 = scmp.eq.s32.totalorder %s18, 0
      %p177 = por %p175, %p176
      %p178 = scmp.ne.s32.totalorder %s166, %s167
      %p179 = scmp.eq.s32.totalorder %s19, 3
      %p180 = por %p178, %p179
      %p182 = scmp.ne.s32.totalorder %s167, %s181
      %p183 = scmp.eq.s32.totalorder %s19, 0
      %p184 = por %p182, %p183
      %s185 = ssub.s32 %s20, %s32
      %s186 = ssub.s32 %s21, %s28
      %s187 = sor.u32 %s185, %s186
      %p188 = scmp.eq.s32.totalorder %s187, 0
      %s190 = sadd.s32 %s189, 1
      %s191 = scalar_select %p188, %s189, %s190
      %p194 = pneg %p188
      %p195 = scmp.eq.s32.totalorder %s13, 3
      %p196 = por %p194, %p195
      %p197 = scmp.ne.s32.totalorder %s189, %s192
      %p198 = scmp.eq.s32.totalorder %s13, 0
      %p199 = por %p197, %p198
      %p200 = scmp.ne.s32.totalorder %s189, %s192
      %p201 = scmp.eq.s32.totalorder %s18, 3
      %p202 = por %p200, %p201
      %p203 = scmp.ne.s32.totalorder %s192, %s193
      %p204 = scmp.eq.s32.totalorder %s18, 0
      %p205 = por %p203, %p204
      %p206 = scmp.ne.s32.totalorder %s192, %s193
      %p207 = scmp.eq.s32.totalorder %s19, 3
      %p208 = por %p206, %p207
      %p210 = scmp.ne.s32.totalorder %s193, %s209
      %p211 = scmp.eq.s32.totalorder %s19, 0
      %p212 = por %p210, %p211
      %p213 = scmp.le.s32.totalorder 1, %s13
      %p214 = scmp.lt.s32.totalorder %s13, 5
      %p215 = pnand %p213, %p214
      %p216 = pneg %p215
      // Predicated region
      $region9: #{attention_layer.1} parent=5 // pred_check
        _
      $region10: #{attention_layer.1} parent=5 // pred_check_branch
        %218 = sbr.rel (%p215) target = $region12
      $region11: #{attention_layer.1} parent=5 // pred_region
        %s219 = ssub.s32 %s13, 1
        // Predicated region
        $region13: #{attention_layer.1} parent=11 // pred_check
          %p220 = pneg %p72
        $region14: #{attention_layer.1} parent=11 // pred_check_branch
          %222 = sbr.rel (%p220) target = $region16
        $region15: #{attention_layer.1} parent=11 // pred_region
          _
        $region16: #{attention_layer.1} parent=11 // pred_fallthru
          _
        // Predicated region
        $region17: #{attention_layer.1} parent=11 // pred_check
          %p223 = pneg %p93
        $region18: #{attention_layer.1} parent=11 // pred_check_branch
          %225 = sbr.rel (%p223) target = $region20
        $region19: #{attention_layer.1} parent=11 // pred_region
          _
        $region20: #{attention_layer.1} parent=11 // pred_fallthru
          _
        // Predicated region
        $region21: #{attention_layer.1} parent=11 // pred_check
          %p226 = pneg %p114
        $region22: #{attention_layer.1} parent=11 // pred_check_branch
          %228 = sbr.rel (%p226) target = $region24
        $region23: #{attention_layer.1} parent=11 // pred_region
          _
        $region24: #{attention_layer.1} parent=11 // pred_fallthru
          _
        // Predicated region
        $region25: #{attention_layer.1} parent=11 // pred_check
          %p229 = pneg %p135
        $region26: #{attention_layer.1} parent=11 // pred_check_branch
          %231 = sbr.rel (%p229) target = $region28
        $region27: #{attention_layer.1} parent=11 // pred_region
          _
        $region28: #{attention_layer.1} parent=11 // pred_fallthru
          _
        // Predicated region
        $region29: #{attention_layer.1} parent=11 // pred_check
          %p232 = pneg %p156
        $region30: #{attention_layer.1} parent=11 // pred_check_branch
          %234 = sbr.rel (%p232) target = $region32
        $region31: #{attention_layer.1} parent=11 // pred_region
          _
        $region32: #{attention_layer.1} parent=11 // pred_fallthru
          _
        // Predicated region
        $region33: #{attention_layer.1} parent=11 // pred_check
          %p235 = pneg %p177
        $region34: #{attention_layer.1} parent=11 // pred_check_branch
          %237 = sbr.rel (%p235) target = $region36
        $region35: #{attention_layer.1} parent=11 // pred_region
          _
        $region36: #{attention_layer.1} parent=11 // pred_fallthru
          _
      $region12: #{attention_layer.1} parent=5 // pred_fallthru
        _
      %p238 = scmp.lt.s32.totalorder %s13, 4
      // Predicated region
      $region37: #{attention_layer.1} parent=5 // pred_check
        %p239 = pneg %p238
      $region38: #{attention_layer.1} parent=5 // pred_check_branch
        %241 = sbr.rel (%p239) target = $region40
      $region39: #{attention_layer.1} parent=5 // pred_region
        // Predicated region
        $region41: #{attention_layer.1} parent=39 // pred_check
          %p242 = pneg %p45
        $region42: #{attention_layer.1} parent=39 // pred_check_branch
          %244 = sbr.rel (%p242) target = $region44
        $region43: #{attention_layer.1} parent=39 // pred_region
          %p245 = scmp.lt.s32.totalorder %s20, 1
          %s246 = scalar_select %p245, %s20, 1
          %s247 = smul.addr %s246, 8
          %s248 = smul.addr %s247, 8
          %s249 = scalar_lea.vmem %s0, %s248
        $region44: #{attention_layer.1} parent=39 // pred_fallthru
          _
      $region40: #{attention_layer.1} parent=5 // pred_fallthru
        _
      %p250 = scmp.le.s32.totalorder 1, %s13
      %p251 = scmp.lt.s32.totalorder %s13, 5
      %p252 = pnand %p250, %p251
      %p253 = pneg %p252
      // Predicated region
      $region45: #{attention_layer.1} parent=5 // pred_check
        _
      $region46: #{attention_layer.1} parent=5 // pred_check_branch
        %255 = sbr.rel (%p252) target = $region48
      $region47: #{attention_layer.1} parent=5 // pred_region
        %s256 = ssub.s32 %s13, 1
        %p257 = scmp.lt.s32.totalorder %s22, 1
        %s258 = scalar_select %p257, %s22, 1
        %s259 = smul.addr %s258, 8
        %s260 = smul.addr %s259, 8
        %s261 = scalar_lea.vmem %s0, %s260
        %p262 = pneg %p51
        %p263 = pneg %p48
        %p264 = pneg %p72
        %p265 = pneg %p69
        %p266 = pneg %p93
        %p267 = pneg %p90
        %p268 = pneg %p114
        %p269 = pneg %p111
        %p270 = pneg %p135
        %p271 = pneg %p132
        %p272 = pneg %p156
        %p273 = pneg %p153
        %p274 = pneg %p177
        %p275 = pneg %p174
        %p276 = pneg %p205
        %p277 = pneg %p202
        %s278 = sand.u32 %s192, 1
        %s279 = sand.u32 %s192, 1
        %s280 = smul.addr %s279, 32
        %s281 = scalar_lea.vmem [#allocation4], %s280
        %p282 = scmp.lt.s32.totalorder %s22, 1
        %s283 = scalar_select %p282, %s22, 1
        %s284 = smul.addr %s283, 8
        %s285 = smul.addr %s284, 8
        %s286 = scalar_lea.vmem %s0, %s285
        %p287 = scmp.eq.s32.totalorder %s23, 0
        // Predicated region
        $region49: #{attention_layer.1} parent=47 // pred_check
          %p288 = pneg %p287
        $region50: #{attention_layer.1} parent=47 // pred_check_branch
          %290 = sbr.rel (%p288) target = $region52
        $region51: #{attention_layer.1} parent=47 // pred_region
          %v291 = vld [vmem:[%s286] sm:$0xff]
          %v292 = vld [vmem:[%s286 + $0x8] sm:$0xff]
          %v293 = vld [vmem:[%s286 + $0x10] sm:$0xff]
          %v294 = vld [vmem:[%s286 + $0x18] sm:$0xff]
          %v295 = vld [vmem:[%s286 + $0x20] sm:$0xff]
          %v296 = vld [vmem:[%s286 + $0x28] sm:$0xff]
          %v297 = vld [vmem:[%s286 + $0x30] sm:$0xff]
          %v298 = vld [vmem:[%s286 + $0x38] sm:$0xff]
          %v299 = vld [vmem:[%s2] sm:$0xff]
          %v300 = vld [vmem:[%s2 + $0x8] sm:$0xff]
          %v301 = vld [vmem:[%s2 + $0x10] sm:$0xff]
          %v302 = vld [vmem:[%s2 + $0x18] sm:$0xff]
          %v303 = vld [vmem:[%s5] sm:$0xff]
          %v304 = vld [vmem:[%s5 + $0x8] sm:$0xff]
          %v305 = vld [vmem:[%s5 + $0x10] sm:$0xff]
          %v306 = vld [vmem:[%s5 + $0x18] sm:$0xff]
          %308 = vset.pattern.permute.xlu0 0
          %309 = vperm.xlu0 %308, %v303
          %v310 = vpop.permute.xlu0 %309
          %313 = vset.pattern.permute.xlu0 0
          %314 = vperm.xlu0 %313, %v304
          %v315 = vpop.permute.xlu0 %314
          %318 = vset.pattern.permute.xlu0 0
          %319 = vperm.xlu0 %318, %v305
          %v320 = vpop.permute.xlu0 %319
          %323 = vset.pattern.permute.xlu0 0
          %324 = vperm.xlu0 %323, %v306
          %v325 = vpop.permute.xlu0 %324
          %vm327 = vcmask 261120
          %v329 = vsel %vm327, %v299, 0
          %v332 = vsel %vm327, %v300, 0
          %v335 = vsel %vm327, %v301, 0
          %v338 = vsel %vm327, %v302, 0
          %340 = vmatprep.subr.mxu0 %v292
          %341 = vmatpush1.msra.mxu0 %v291
          %342 = vmatprep.subr.mxu0 %v294
          %343 = vmatpush1.msra.mxu0 %v293
          %344 = vmatprep.subr.mxu0 %v296
          %345 = vmatpush1.msra.mxu0 %v295
          %346 = vmatprep.subr.mxu0 %v298
          %347 = vmatpush1.msra.mxu0 %v297
          %348 = vmatprep.subr.mxu0 0.0
          %349 = vmatpush1.msra.mxu0 0.0
          %350 = vmatprep.subr.mxu0 0.0
          %351 = vmatpush1.msra.mxu0 0.0
          %352 = vmatprep.subr.mxu0 0.0
          %353 = vmatpush1.msra.mxu0 0.0
          %354 = vmatprep.subr.mxu0 0.0
          %355 = vmatpush1.msra.mxu0 0.0
          %356 = vmatprep.subr.mxu0 0.0
          %357 = vmatpush1.msra.mxu0 0.0
          %358 = vmatprep.subr.mxu0 0.0
          %359 = vmatpush1.msra.mxu0 0.0
          %360 = vmatprep.subr.mxu0 0.0
          %361 = vmatpush1.msra.mxu0 0.0
          %362 = vmatprep.subr.mxu0 0.0
          %363 = vmatpush1.msra.mxu0 0.0
          %364 = vmatprep.subr.mxu0 0.0
          %365 = vmatpush1.msra.mxu0 0.0
          %366 = vmatprep.subr.mxu0 0.0
          %367 = vmatpush1.msra.mxu0 0.0
          %368 = vmatprep.subr.mxu0 0.0
          %369 = vmatpush1.msra.mxu0 0.0
          %370 = vmatprep.subr.mxu0 0.0
          %371 = vmatpush1.msra.mxu0 0.0
          %372 = vmatprep.subr.mxu0 0.0
          %373 = vmatpush1.msra.mxu0 0.0
          %374 = vmatprep.subr.mxu0 0.0
          %375 = vmatpush1.msra.mxu0 0.0
          %376 = vmatprep.subr.mxu0 0.0
          %377 = vmatpush1.msra.mxu0 0.0
          %378 = vmatprep.subr.mxu0 0.0
          %379 = vmatpush1.msra.mxu0 0.0
          %380 = vmatprep.subr.mxu0 0.0
          %381 = vmatpush1.msra.mxu0 0.0
          %382 = vmatprep.subr.mxu0 0.0
          %383 = vmatpush1.msra.mxu0 0.0
          %384 = vmatprep.subr.mxu0 0.0
          %385 = vmatpush1.msra.mxu0 0.0
          %386 = vmatprep.subr.mxu0 0.0
          %387 = vmatpush1.msra.mxu0 0.0
          %388 = vmatprep.subr.mxu0 0.0
          %389 = vmatpush1.msra.mxu0 0.0
          %390 = vmatprep.subr.mxu0 0.0
          %391 = vmatpush1.msra.mxu0 0.0
          %392 = vmatprep.subr.mxu0 0.0
          %393 = vmatpush1.msra.mxu0 0.0
          %394 = vmatprep.subr.mxu0 0.0
          %395 = vmatpush1.msra.mxu0 0.0
          %396 = vmatprep.subr.mxu0 0.0
          %397 = vmatpush1.msra.mxu0 0.0
          %398 = vmatprep.subr.mxu0 0.0
          %399 = vmatpush1.msra.mxu0 0.0
          %400 = vmatprep.subr.mxu0 0.0
          %401 = vmatpush1.msra.mxu0 0.0
          %402 = vmatprep.subr.mxu0 0.0
          %403 = vmatpush1.msra.mxu0 0.0
          %404 = vmatprep.mubr.f32.mxu0 0.0
          %405 = vmatmul.mubr.f32.gmra.mrb[0].mxu0 %v329
          %v406 = vpop.f32.mrb[0].mxu0
          %v407 = vadd.f32 %v310, %v406
          %v408 = vpop.f32.mrb[0].mxu0
          %v409 = vadd.f32 %v310, %v408
          %410 = vmatprep.mubr.f32.mxu0 0.0
          %411 = vmatmul.mubr.f32.gmra.mrb[0].mxu0 %v332
          %v412 = vpop.f32.mrb[0].mxu0
          %v413 = vadd.f32 %v315, %v412
          %v414 = vpop.f32.mrb[0].mxu0
          %v415 = vadd.f32 %v315, %v414
          %416 = vmatprep.mubr.f32.mxu0 0.0
          %417 = vmatmul.mubr.f32.gmra.mrb[0].mxu0 %v335
          %v418 = vpop.f32.mrb[0].mxu0
          %v419 = vadd.f32 %v320, %v418
          %v420 = vpop.f32.mrb[0].mxu0
          %v421 = vadd.f32 %v320, %v420
          %422 = vmatprep.mubr.f32.mxu0 0.0
          %423 = vmatmul.mubr.f32.gmra.mrb[0].mxu0 %v338
          %v424 = vpop.f32.mrb[0].mxu0
          %v425 = vadd.f32 %v325, %v424
          %v426 = vpop.f32.mrb[0].mxu0
          %v427 = vadd.f32 %v325, %v426
          %428 = vdwg.mxu0
          %429 = vst [vmem:[#allocation2] sm:$0xff] %v407
          %430 = vst [vmem:[#allocation2 + $0x8] sm:$0xff] %v409
          %431 = vst [vmem:[#allocation2 + $0x10] sm:$0xff] %v413
          %432 = vst [vmem:[#allocation2 + $0x18] sm:$0xff] %v415
          %433 = vst [vmem:[#allocation2 + $0x20] sm:$0xff] %v419
          %434 = vst [vmem:[#allocation2 + $0x28] sm:$0xff] %v421
          %435 = vst [vmem:[#allocation2 + $0x30] sm:$0xff] %v425
          %436 = vst [vmem:[#allocation2 + $0x38] sm:$0xff] %v427
          %v437 = vld [vmem:[%s3] sm:$0xff]
          %v438 = vld [vmem:[%s3 + $0x8] sm:$0xff]
          %v439 = vld [vmem:[%s3 + $0x10] sm:$0xff]
          %v440 = vld [vmem:[%s3 + $0x18] sm:$0xff]
          %v441 = vld [vmem:[%s6] sm:$0xff]
          %v442 = vld [vmem:[%s6 + $0x8] sm:$0xff]
          %v443 = vld [vmem:[%s6 + $0x10] sm:$0xff]
          %v444 = vld [vmem:[%s6 + $0x18] sm:$0xff]
          %446 = vset.pattern.permute.xlu0 0
          %447 = vperm.xlu0 %446, %v441
          %v448 = vpop.permute.xlu0 %447
          %451 = vset.pattern.permute.xlu0 0
          %452 = vperm.xlu0 %451, %v442
          %v453 = vpop.permute.xlu0 %452
          %456 = vset.pattern.permute.xlu0 0
          %457 = vperm.xlu0 %456, %v443
          %v458 = vpop.permute.xlu0 %457
          %461 = vset.pattern.permute.xlu0 0
          %462 = vperm.xlu0 %461, %v444
          %v463 = vpop.permute.xlu0 %462
          %v466 = vsel %vm327, %v437, 0
          %v469 = vsel %vm327, %v438, 0
          %v472 = vsel %vm327, %v439, 0
          %v475 = vsel %vm327, %v440, 0
          %477 = vmatprep.subr.mxu0 %v292
          %478 = vmatpush1.msra.mxu0 %v291
          %479 = vmatprep.subr.mxu0 %v294
          %480 = vmatpush1.msra.mxu0 %v293
          %481 = vmatprep.subr.mxu0 %v296
          %482 = vmatpush1.msra.mxu0 %v295
          %483 = vmatprep.subr.mxu0 %v298
          %484 = vmatpush1.msra.mxu0 %v297
          %485 = vmatprep.subr.mxu0 0.0
          %486 = vmatpush1.msra.mxu0 0.0
          %487 = vmatprep.subr.mxu0 0.0
          %488 = vmatpush1.msra.mxu0 0.0
          %489 = vmatprep.subr.mxu0 0.0
          %490 = vmatpush1.msra.mxu0 0.0
          %491 = vmatprep.subr.mxu0 0.0
          %492 = vmatpush1.msra.mxu0 0.0
          %493 = vmatprep.subr.mxu0 0.0
          %494 = vmatpush1.msra.mxu0 0.0
          %495 = vmatprep.subr.mxu0 0.0
          %496 = vmatpush1.msra.mxu0 0.0
          %497 = vmatprep.subr.mxu0 0.0
          %498 = vmatpush1.msra.mxu0 0.0
          %499 = vmatprep.subr.mxu0 0.0
          %500 = vmatpush1.msra.mxu0 0.0
          %501 = vmatprep.subr.mxu0 0.0
          %502 = vmatpush1.msra.mxu0 0.0
          %503 = vmatprep.subr.mxu0 0.0
          %504 = vmatpush1.msra.mxu0 0.0
          %505 = vmatprep.subr.mxu0 0.0
          %506 = vmatpush1.msra.mxu0 0.0
          %507 = vmatprep.subr.mxu0 0.0
          %508 = vmatpush1.msra.mxu0 0.0
          %509 = vmatprep.subr.mxu0 0.0
          %510 = vmatpush1.msra.mxu0 0.0
          %511 = vmatprep.subr.mxu0 0.0
          %512 = vmatpush1.msra.mxu0 0.0
          %513 = vmatprep.subr.mxu0 0.0
          %514 = vmatpush1.msra.mxu0 0.0
          %515 = vmatprep.subr.mxu0 0.0
          %516 = vmatpush1.msra.mxu0 0.0
          %517 = vmatprep.subr.mxu0 0.0
          %518 = vmatpush1.msra.mxu0 0.0
          %519 = vmatprep.subr.mxu0 0.0
          %520 = vmatpush1.msra.mxu0 0.0
          %521 = vmatprep.subr.mxu0 0.0
          %522 = vmatpush1.msra.mxu0 0.0
          %523 = vmatprep.subr.mxu0 0.0
          %524 = vmatpush1.msra.mxu0 0.0
          %525 = vmatprep.subr.mxu0 0.0
          %526 = vmatpush1.msra.mxu0 0.0
          %527 = vmatprep.subr.mxu0 0.0
          %528 = vmatpush1.msra.mxu0 0.0
          %529 = vmatprep.subr.mxu0 0.0
          %530 = vmatpush1.msra.mxu0 0.0
          %531 = vmatprep.subr.mxu0 0.0
          %532 = vmatpush1.msra.mxu0 0.0
          %533 = vmatprep.subr.mxu0 0.0
          %534 = vmatpush1.msra.mxu0 0.0
          %535 = vmatprep.subr.mxu0 0.0
          %536 = vmatpush1.msra.mxu0 0.0
          %537 = vmatprep.subr.mxu0 0.0
          %538 = vmatpush1.msra.mxu0 0.0
          %539 = vmatprep.subr.mxu0 0.0
          %540 = vmatpush1.msra.mxu0 0.0
          %541 = vmatprep.mubr.f32.mxu0 0.0
          %542 = vmatmul.mubr.f32.gmra.mrb[0].mxu0 %v466
          %v543 = vpop.f32.mrb[0].mxu0
          %v544 = vadd.f32 %v448, %v543
          %v545 = vpop.f32.mrb[0].mxu0
          %v546 = vadd.f32 %v448, %v545
          %547 = vmatprep.mubr.f32.mxu0 0.0
          %548 = vmatmul.mubr.f32.gmra.mrb[0].mxu0 %v469
          %v549 = vpop.f32.mrb[0].mxu0
          %v550 = vadd.f32 %v453, %v549
          %v551 = vpop.f32.mrb[0].mxu0
          %v552 = vadd.f32 %v453, %v551
          %553 = vmatprep.mubr.f32.mxu0 0.0
          %554 = vmatmul.mubr.f32.gmra.mrb[0].mxu0 %v472
          %v555 = vpop.f32.mrb[0].mxu0
          %v556 = vadd.f32 %v458, %v555
          %v557 = vpop.f32.mrb[0].mxu0
          %v558 = vadd.f32 %v458, %v557
          %559 = vmatprep.mubr.f32.mxu0 0.0
          %560 = vmatmul.mubr.f32.gmra.mrb[0].mxu0 %v475
          %v561 = vpop.f32.mrb[0].mxu0
          %v562 = vadd.f32 %v463, %v561
          %v563 = vpop.f32.mrb[0].mxu0
          %v564 = vadd.f32 %v463, %v563
          %565 = vdwg.mxu0
          %566 = vxpose.xlu0.b32.start [1/16] %v544, 128
          %567 = vxpose.xlu0.b32.cont [2/16] %v550, 128
          %568 = vxpose.xlu0.b32.cont [3/16] %v556, 128
          %569 = vxpose.xlu0.b32.cont [4/16] %v562, 128
          %570 = vxpose.xlu0.b32.cont [5/16] 0.0, 128
          %571 = vxpose.xlu0.b32.cont [6/16] 0.0, 128
          %572 = vxpose.xlu0.b32.cont [7/16] 0.0, 128
          %573 = vxpose.xlu0.b32.cont [8/16] 0.0, 128
          %574 = vxpose.xlu0.b32.cont [9/16] 0.0, 128
          %575 = vxpose.xlu0.b32.cont [10/16] 0.0, 128
          %576 = vxpose.xlu0.b32.cont [11/16] 0.0, 128
          %577 = vxpose.xlu0.b32.cont [12/16] 0.0, 128
          %578 = vxpose.xlu0.b32.cont [13/16] 0.0, 128
          %579 = vxpose.xlu0.b32.cont [14/16] 0.0, 128
          %580 = vxpose.xlu0.b32.cont [15/16] 0.0, 128
          %581 = vxpose.xlu0.b32.end [16/16] 0.0, 128
          %v582 = vpop.trf.xlu0
          %v583 = vpop.trf.xlu0
          %v584 = vpop.trf.xlu0
          %v585 = vpop.trf.xlu0
          %v586 = vpop.trf.xlu0
          %v587 = vpop.trf.xlu0
          %v588 = vpop.trf.xlu0
          %v589 = vpop.trf.xlu0
          %v590 = vpop.trf.xlu0
          %v591 = vpop.trf.xlu0
          %v592 = vpop.trf.xlu0
          %v593 = vpop.trf.xlu0
          %v594 = vpop.trf.xlu0
          %v595 = vpop.trf.xlu0
          %v596 = vpop.trf.xlu0
          %v597 = vpop.trf.xlu0
          %598 = vxpose.xlu0.b32.start [1/16] %v546, 128
          %599 = vxpose.xlu0.b32.cont [2/16] %v552, 128
          %600 = vxpose.xlu0.b32.cont [3/16] %v558, 128
          %601 = vxpose.xlu0.b32.cont [4/16] %v564, 128
          %602 = vxpose.xlu0.b32.cont [5/16] 0.0, 128
          %603 = vxpose.xlu0.b32.cont [6/16] 0.0, 128
          %604 = vxpose.xlu0.b32.cont [7/16] 0.0, 128
          %605 = vxpose.xlu0.b32.cont [8/16] 0.0, 128
          %606 = vxpose.xlu0.b32.cont [9/16] 0.0, 128
          %607 = vxpose.xlu0.b32.cont [10/16] 0.0, 128
          %608 = vxpose.xlu0.b32.cont [11/16] 0.0, 128
          %609 = vxpose.xlu0.b32.cont [12/16] 0.0, 128
          %610 = vxpose.xlu0.b32.cont [13/16] 0.0, 128
          %611 = vxpose.xlu0.b32.cont [14/16] 0.0, 128
          %612 = vxpose.xlu0.b32.cont [15/16] 0.0, 128
          %613 = vxpose.xlu0.b32.end [16/16] 0.0, 128
          %v614 = vpop.trf.xlu0
          %v615 = vpop.trf.xlu0
          %v616 = vpop.trf.xlu0
          %v617 = vpop.trf.xlu0
          %v618 = vpop.trf.xlu0
          %v619 = vpop.trf.xlu0
          %v620 = vpop.trf.xlu0
          %v621 = vpop.trf.xlu0
          %v622 = vpop.trf.xlu0
          %v623 = vpop.trf.xlu0
          %v624 = vpop.trf.xlu0
          %v625 = vpop.trf.xlu0
          %v626 = vpop.trf.xlu0
          %v627 = vpop.trf.xlu0
          %v628 = vpop.trf.xlu0
          %v629 = vpop.trf.xlu0
          %630 = vst.msk [vmem:[#allocation3] sm:$0xff] %vm327, %v582
          %631 = vst.msk [vmem:[#allocation3 + $0x8] sm:$0xff] %vm327, %v583
          %632 = vst.msk [vmem:[#allocation3 + $0x10] sm:$0xff] %vm327, %v584
          %633 = vst.msk [vmem:[#allocation3 + $0x18] sm:$0xff] %vm327, %v585
          %634 = vst.msk [vmem:[#allocation3 + $0x20] sm:$0xff] %vm327, %v586
          %635 = vst.msk [vmem:[#allocation3 + $0x28] sm:$0xff] %vm327, %v587
          %636 = vst.msk [vmem:[#allocation3 + $0x30] sm:$0xff] %vm327, %v588
          %637 = vst.msk [vmem:[#allocation3 + $0x38] sm:$0xff] %vm327, %v589
          %638 = vst.msk [vmem:[#allocation3 + $0x40] sm:$0xff] %vm327, %v590
          %639 = vst.msk [vmem:[#allocation3 + $0x48] sm:$0xff] %vm327, %v591
          %640 = vst.msk [vmem:[#allocation3 + $0x50] sm:$0xff] %vm327, %v592
          %641 = vst.msk [vmem:[#allocation3 + $0x58] sm:$0xff] %vm327, %v593
          %642 = vst.msk [vmem:[#allocation3 + $0x60] sm:$0xff] %vm327, %v594
          %643 = vst.msk [vmem:[#allocation3 + $0x68] sm:$0xff] %vm327, %v595
          %644 = vst.msk [vmem:[#allocation3 + $0x70] sm:$0xff] %vm327, %v596
          %645 = vst.msk [vmem:[#allocation3 + $0x78] sm:$0xff] %vm327, %v597
          %646 = vst.msk [vmem:[#allocation3 + $0x80] sm:$0xff] %vm327, %v614
          %647 = vst.msk [vmem:[#allocation3 + $0x88] sm:$0xff] %vm327, %v615
          %648 = vst.msk [vmem:[#allocation3 + $0x90] sm:$0xff] %vm327, %v616
          %649 = vst.msk [vmem:[#allocation3 + $0x98] sm:$0xff] %vm327, %v617
          %650 = vst.msk [vmem:[#allocation3 + $0xa0] sm:$0xff] %vm327, %v618
          %651 = vst.msk [vmem:[#allocation3 + $0xa8] sm:$0xff] %vm327, %v619
          %652 = vst.msk [vmem:[#allocation3 + $0xb0] sm:$0xff] %vm327, %v620
          %653 = vst.msk [vmem:[#allocation3 + $0xb8] sm:$0xff] %vm327, %v621
          %654 = vst.msk [vmem:[#allocation3 + $0xc0] sm:$0xff] %vm327, %v622
          %655 = vst.msk [vmem:[#allocation3 + $0xc8] sm:$0xff] %vm327, %v623
          %656 = vst.msk [vmem:[#allocation3 + $0xd0] sm:$0xff] %vm327, %v624
          %657 = vst.msk [vmem:[#allocation3 + $0xd8] sm:$0xff] %vm327, %v625
          %658 = vst.msk [vmem:[#allocation3 + $0xe0] sm:$0xff] %vm327, %v626
          %659 = vst.msk [vmem:[#allocation3 + $0xe8] sm:$0xff] %vm327, %v627
          %660 = vst.msk [vmem:[#allocation3 + $0xf0] sm:$0xff] %vm327, %v628
          %661 = vst.msk [vmem:[#allocation3 + $0xf8] sm:$0xff] %vm327, %v629
        $region52: #{attention_layer.1} parent=47 // pred_fallthru
          _
        %s662 = smul.u32 %s23, 128
        %s663 = sshra.s32 %s662, 7
        %s664 = sand.u32 %s662, 127
        %s665 = smul.addr %s663, 8
        %s666 = scalar_lea.vmem %s286, %s665
        %v667 = vld [vmem:[%s666] sm:$0xff]
        %v668 = vld [vmem:[%s666 + $0x10] sm:$0xff]
        %v669 = vld [vmem:[%s666 + $0x20] sm:$0xff]
        %v670 = vld [vmem:[%s666 + $0x30] sm:$0xff]
        %v671 = vld [vmem:[%s1] sm:$0xff]
        %v672 = vld [vmem:[%s1 + $0x8] sm:$0xff]
        %v673 = vld [vmem:[%s1 + $0x10] sm:$0xff]
        %v674 = vld [vmem:[%s1 + $0x18] sm:$0xff]
        %v675 = vld [vmem:[%s4] sm:$0xff]
        %v676 = vld [vmem:[%s4 + $0x8] sm:$0xff]
        %v677 = vld [vmem:[%s4 + $0x10] sm:$0xff]
        %v678 = vld [vmem:[%s4 + $0x18] sm:$0xff]
        %680 = vset.pattern.permute.xlu0 0
        %681 = vperm.xlu0 %680, %v675
        %v682 = vpop.permute.xlu0 %681
        %685 = vset.pattern.permute.xlu0 0
        %686 = vperm.xlu0 %685, %v676
        %v687 = vpop.permute.xlu0 %686
        %690 = vset.pattern.permute.xlu0 0
        %691 = vperm.xlu0 %690, %v677
        %v692 = vpop.permute.xlu0 %691
        %695 = vset.pattern.permute.xlu0 0
        %696 = vperm.xlu0 %695, %v678
        %v697 = vpop.permute.xlu0 %696
        %vm699 = vcmask 261120
        %v701 = vsel %vm699, %v671, 0
        %v704 = vsel %vm699, %v672, 0
        %v707 = vsel %vm699, %v673, 0
        %v710 = vsel %vm699, %v674, 0
        %712 = vmatprep.subr.mxu0 0.0
        %713 = vmatpush1.msra.mxu0 %v667
        %714 = vmatprep.subr.mxu0 0.0
        %715 = vmatpush1.msra.mxu0 %v668
        %716 = vmatprep.subr.mxu0 0.0
        %717 = vmatpush1.msra.mxu0 %v669
        %718 = vmatprep.subr.mxu0 0.0
        %719 = vmatpush1.msra.mxu0 %v670
        %720 = vmatprep.subr.mxu0 0.0
        %721 = vmatpush1.msra.mxu0 0.0
        %722 = vmatprep.subr.mxu0 0.0
        %723 = vmatpush1.msra.mxu0 0.0
        %724 = vmatprep.subr.mxu0 0.0
        %725 = vmatpush1.msra.mxu0 0.0
        %726 = vmatprep.subr.mxu0 0.0
        %727 = vmatpush1.msra.mxu0 0.0
        %728 = vmatprep.subr.mxu0 0.0
        %729 = vmatpush1.msra.mxu0 0.0
        %730 = vmatprep.subr.mxu0 0.0
        %731 = vmatpush1.msra.mxu0 0.0
        %732 = vmatprep.subr.mxu0 0.0
        %733 = vmatpush1.msra.mxu0 0.0
        %734 = vmatprep.subr.mxu0 0.0
        %735 = vmatpush1.msra.mxu0 0.0
        %736 = vmatprep.subr.mxu0 0.0
        %737 = vmatpush1.msra.mxu0 0.0
        %738 = vmatprep.subr.mxu0 0.0
        %739 = vmatpush1.msra.mxu0 0.0
        %740 = vmatprep.subr.mxu0 0.0
        %741 = vmatpush1.msra.mxu0 0.0
        %742 = vmatprep.subr.mxu0 0.0
        %743 = vmatpush1.msra.mxu0 0.0
        %744 = vmatprep.subr.mxu0 0.0
        %745 = vmatpush1.msra.mxu0 0.0
        %746 = vmatprep.subr.mxu0 0.0
        %747 = vmatpush1.msra.mxu0 0.0
        %748 = vmatprep.subr.mxu0 0.0
        %749 = vmatpush1.msra.mxu0 0.0
        %750 = vmatprep.subr.mxu0 0.0
        %751 = vmatpush1.msra.mxu0 0.0
        %752 = vmatprep.subr.mxu0 0.0
        %753 = vmatpush1.msra.mxu0 0.0
        %754 = vmatprep.subr.mxu0 0.0
        %755 = vmatpush1.msra.mxu0 0.0
        %756 = vmatprep.subr.mxu0 0.0
        %757 = vmatpush1.msra.mxu0 0.0
        %758 = vmatprep.subr.mxu0 0.0
        %759 = vmatpush1.msra.mxu0 0.0
        %760 = vmatprep.subr.mxu0 0.0
        %761 = vmatpush1.msra.mxu0 0.0
        %762 = vmatprep.subr.mxu0 0.0
        %763 = vmatpush1.msra.mxu0 0.0
        %764 = vmatprep.subr.mxu0 0.0
        %765 = vmatpush1.msra.mxu0 0.0
        %766 = vmatprep.subr.mxu0 0.0
        %767 = vmatpush1.msra.mxu0 0.0
        %768 = vmatprep.subr.mxu0 0.0
        %769 = vmatpush1.msra.mxu0 0.0
        %770 = vmatprep.subr.mxu0 0.0
        %771 = vmatpush1.msra.mxu0 0.0
        %772 = vmatprep.subr.mxu0 0.0
        %773 = vmatpush1.msra.mxu0 0.0
        %774 = vmatprep.subr.mxu0 0.0
        %775 = vmatpush1.msra.mxu0 0.0
        %776 = vmatprep.mubr.f32.mxu0 0.0
        %777 = vmatmul.mubr.f32.gmra.mrb[0].mxu0 %v701
        %v778 = vpop.f32.mrb[0].mxu0
        %v779 = vadd.f32 %v682, %v778
        %v780 = vpop.f32.mrb[0].mxu0
        %781 = vmatprep.mubr.f32.mxu0 0.0
        %782 = vmatmul.mubr.f32.gmra.mrb[0].mxu0 %v704
        %v783 = vpop.f32.mrb[0].mxu0
        %v784 = vadd.f32 %v687, %v783
        %v785 = vpop.f32.mrb[0].mxu0
        %786 = vmatprep.mubr.f32.mxu0 0.0
        %787 = vmatmul.mubr.f32.gmra.mrb[0].mxu0 %v707
        %v788 = vpop.f32.mrb[0].mxu0
        %v789 = vadd.f32 %v692, %v788
        %v790 = vpop.f32.mrb[0].mxu0
        %791 = vmatprep.mubr.f32.mxu0 0.0
        %792 = vmatmul.mubr.f32.gmra.mrb[0].mxu0 %v710
        %v793 = vpop.f32.mrb[0].mxu0
        %v794 = vadd.f32 %v697, %v793
        %v795 = vpop.f32.mrb[0].mxu0
        %796 = vdwg.mxu0
        %797 = vxpose.xlu0.b32.start [1/16] %v779, 128
        %798 = vxpose.xlu0.b32.cont [2/16] %v784, 128
        %799 = vxpose.xlu0.b32.cont [3/16] %v789, 128
        %800 = vxpose.xlu0.b32.cont [4/16] %v794, 128
        %801 = vxpose.xlu0.b32.cont [5/16] 0.0, 128
        %802 = vxpose.xlu0.b32.cont [6/16] 0.0, 128
        %803 = vxpose.xlu0.b32.cont [7/16] 0.0, 128
        %804 = vxpose.xlu0.b32.cont [8/16] 0.0, 128
        %805 = vxpose.xlu0.b32.cont [9/16] 0.0, 128
        %806 = vxpose.xlu0.b32.cont [10/16] 0.0, 128
        %807 = vxpose.xlu0.b32.cont [11/16] 0.0, 128
        %808 = vxpose.xlu0.b32.cont [12/16] 0.0, 128
        %809 = vxpose.xlu0.b32.cont [13/16] 0.0, 128
        %810 = vxpose.xlu0.b32.cont [14/16] 0.0, 128
        %811 = vxpose.xlu0.b32.cont [15/16] 0.0, 128
        %812 = vxpose.xlu0.b32.end [16/16] 0.0, 128
        %v813 = vpop.trf.xlu0
        %v814 = vpop.trf.xlu0
        %v815 = vpop.trf.xlu0
        %v816 = vpop.trf.xlu0
        %v817 = vpop.trf.xlu0
        %v818 = vpop.trf.xlu0
        %v819 = vpop.trf.xlu0
        %v820 = vpop.trf.xlu0
        %v821 = vpop.trf.xlu0
        %v822 = vpop.trf.xlu0
        %v823 = vpop.trf.xlu0
        %v824 = vpop.trf.xlu0
        %v825 = vpop.trf.xlu0
        %v826 = vpop.trf.xlu0
        %v827 = vpop.trf.xlu0
        %v828 = vpop.trf.xlu0
        %v829 = vld [vmem:[#allocation2] sm:$0xff]
        %v830 = vld [vmem:[#allocation2 + $0x8] sm:$0xff]
        %v831 = vld [vmem:[#allocation2 + $0x10] sm:$0xff]
        %v832 = vld [vmem:[#allocation2 + $0x18] sm:$0xff]
        %v833 = vld [vmem:[#allocation2 + $0x20] sm:$0xff]
        %v834 = vld [vmem:[#allocation2 + $0x28] sm:$0xff]
        %v835 = vld [vmem:[#allocation2 + $0x30] sm:$0xff]
        %v836 = vld [vmem:[#allocation2 + $0x38] sm:$0xff]
        %v838 = vsel %vm699, %v813, 0
        %v841 = vsel %vm699, %v814, 0
        %v844 = vsel %vm699, %v815, 0
        %v847 = vsel %vm699, %v816, 0
        %v850 = vsel %vm699, %v817, 0
        %v853 = vsel %vm699, %v818, 0
        %v856 = vsel %vm699, %v819, 0
        %v859 = vsel %vm699, %v820, 0
        %v862 = vsel %vm699, %v821, 0
        %v865 = vsel %vm699, %v822, 0
        %v868 = vsel %vm699, %v823, 0
        %v871 = vsel %vm699, %v824, 0
        %v874 = vsel %vm699, %v825, 0
        %v877 = vsel %vm699, %v826, 0
        %v880 = vsel %vm699, %v827, 0
        %v883 = vsel %vm699, %v828, 0
        %885 = vmatprep.subr.mxu0 %v830
        %886 = vmatpush1.msra.mxu0 %v829
        %887 = vmatprep.subr.mxu0 %v832
        %888 = vmatpush1.msra.mxu0 %v831
        %889 = vmatprep.subr.mxu0 %v834
        %890 = vmatpush1.msra.mxu0 %v833
        %891 = vmatprep.subr.mxu0 %v836
        %892 = vmatpush1.msra.mxu0 %v835
        %893 = vmatprep.subr.mxu0 0.0
        %894 = vmatpush1.msra.mxu0 0.0
        %895 = vmatprep.subr.mxu0 0.0
        %896 = vmatpush1.msra.mxu0 0.0
        %897 = vmatprep.subr.mxu0 0.0
        %898 = vmatpush1.msra.mxu0 0.0
        %899 = vmatprep.subr.mxu0 0.0
        %900 = vmatpush1.msra.mxu0 0.0
        %901 = vmatprep.subr.mxu0 0.0
        %902 = vmatpush1.msra.mxu0 0.0
        %903 = vmatprep.subr.mxu0 0.0
        %904 = vmatpush1.msra.mxu0 0.0
        %905 = vmatprep.subr.mxu0 0.0
        %906 = vmatpush1.msra.mxu0 0.0
        %907 = vmatprep.subr.mxu0 0.0
        %908 = vmatpush1.msra.mxu0 0.0
        %909 = vmatprep.subr.mxu0 0.0
        %910 = vmatpush1.msra.mxu0 0.0
        %911 = vmatprep.subr.mxu0 0.0
        %912 = vmatpush1.msra.mxu0 0.0
        %913 = vmatprep.subr.mxu0 0.0
        %914 = vmatpush1.msra.mxu0 0.0
        %915 = vmatprep.subr.mxu0 0.0
        %916 = vmatpush1.msra.mxu0 0.0
        %917 = vmatprep.subr.mxu0 0.0
        %918 = vmatpush1.msra.mxu0 0.0
        %919 = vmatprep.subr.mxu0 0.0
        %920 = vmatpush1.msra.mxu0 0.0
        %921 = vmatprep.subr.mxu0 0.0
        %922 = vmatpush1.msra.mxu0 0.0
        %923 = vmatprep.subr.mxu0 0.0
        %924 = vmatpush1.msra.mxu0 0.0
        %925 = vmatprep.subr.mxu0 0.0
        %926 = vmatpush1.msra.mxu0 0.0
        %927 = vmatprep.subr.mxu0 0.0
        %928 = vmatpush1.msra.mxu0 0.0
        %929 = vmatprep.subr.mxu0 0.0
        %930 = vmatpush1.msra.mxu0 0.0
        %931 = vmatprep.subr.mxu0 0.0
        %932 = vmatpush1.msra.mxu0 0.0
        %933 = vmatprep.subr.mxu0 0.0
        %934 = vmatpush1.msra.mxu0 0.0
        %935 = vmatprep.subr.mxu0 0.0
        %936 = vmatpush1.msra.mxu0 0.0
        %937 = vmatprep.subr.mxu0 0.0
        %938 = vmatpush1.msra.mxu0 0.0
        %939 = vmatprep.subr.mxu0 0.0
        %940 = vmatpush1.msra.mxu0 0.0
        %941 = vmatprep.subr.mxu0 0.0
        %942 = vmatpush1.msra.mxu0 0.0
        %943 = vmatprep.subr.mxu0 0.0
        %944 = vmatpush1.msra.mxu0 0.0
        %945 = vmatprep.subr.mxu0 0.0
        %946 = vmatpush1.msra.mxu0 0.0
        %947 = vmatprep.subr.mxu0 0.0
        %948 = vmatpush1.msra.mxu0 0.0
        %949 = vmatprep.mubr.f32.mxu0 0.0
        %950 = vmatmul.mubr.f32.gmra.mrb[0].mxu0 %v838
        %v951 = vpop.f32.mrb[0].mxu0
        %v952 = vadd.f32 0.0, %v951
        %v953 = vpop.f32.mrb[0].mxu0
        %v954 = vadd.f32 0.0, %v953
        %955 = vmatprep.mubr.f32.mxu0 0.0
        %956 = vmatmul.mubr.f32.gmra.mrb[0].mxu0 %v841
        %v957 = vpop.f32.mrb[0].mxu0
        %v958 = vadd.f32 0.0, %v957
        %v959 = vpop.f32.mrb[0].mxu0
        %v960 = vadd.f32 0.0, %v959
        %961 = vmatprep.mubr.f32.mxu0 0.0
        %962 = vmatmul.mubr.f32.gmra.mrb[0].mxu0 %v844
        %v963 = vpop.f32.mrb[0].mxu0
        %v964 = vadd.f32 0.0, %v963
        %v965 = vpop.f32.mrb[0].mxu0
        %v966 = vadd.f32 0.0, %v965
        %967 = vmatprep.mubr.f32.mxu0 0.0
        %968 = vmatmul.mubr.f32.gmra.mrb[0].mxu0 %v847
        %v969 = vpop.f32.mrb[0].mxu0
        %v970 = vadd.f32 0.0, %v969
        %v971 = vpop.f32.mrb[0].mxu0
        %v972 = vadd.f32 0.0, %v971
        %973 = vmatprep.mubr.f32.mxu0 0.0
        %974 = vmatmul.mubr.f32.gmra.mrb[0].mxu0 %v850
        %v975 = vpop.f32.mrb[0].mxu0
        %v976 = vadd.f32 0.0, %v975
        %v977 = vpop.f32.mrb[0].mxu0
        %v978 = vadd.f32 0.0, %v977
        %979 = vmatprep.mubr.f32.mxu0 0.0
        %980 = vmatmul.mubr.f32.gmra.mrb[0].mxu0 %v853
        %v981 = vpop.f32.mrb[0].mxu0
        %v982 = vadd.f32 0.0, %v981
        %v983 = vpop.f32.mrb[0].mxu0
        %v984 = vadd.f32 0.0, %v983
        %985 = vmatprep.mubr.f32.mxu0 0.0
        %986 = vmatmul.mubr.f32.gmra.mrb[0].mxu0 %v856
        %v987 = vpop.f32.mrb[0].mxu0
        %v988 = vadd.f32 0.0, %v987
        %v989 = vpop.f32.mrb[0].mxu0
        %v990 = vadd.f32 0.0, %v989
        %991 = vmatprep.mubr.f32.mxu0 0.0
        %992 = vmatmul.mubr.f32.gmra.mrb[0].mxu0 %v859
        %v993 = vpop.f32.mrb[0].mxu0
        %v994 = vadd.f32 0.0, %v993
        %v995 = vpop.f32.mrb[0].mxu0
        %v996 = vadd.f32 0.0, %v995
        %997 = vmatprep.mubr.f32.mxu0 0.0
        %998 = vmatmul.mubr.f32.gmra.mrb[0].mxu0 %v862
        %v999 = vpop.f32.mrb[0].mxu0
        %v1000 = vadd.f32 0.0, %v999
        %v1001 = vpop.f32.mrb[0].mxu0
        %v1002 = vadd.f32 0.0, %v1001
        %1003 = vmatprep.mubr.f32.mxu0 0.0
        %1004 = vmatmul.mubr.f32.gmra.mrb[0].mxu0 %v865
        %v1005 = vpop.f32.mrb[0].mxu0
        %v1006 = vadd.f32 0.0, %v1005
        %v1007 = vpop.f32.mrb[0].mxu0
        %v1008 = vadd.f32 0.0, %v1007
        %1009 = vmatprep.mubr.f32.mxu0 0.0
        %1010 = vmatmul.mubr.f32.gmra.mrb[0].mxu0 %v868
        %v1011 = vpop.f32.mrb[0].mxu0
        %v1012 = vadd.f32 0.0, %v1011
        %v1013 = vpop.f32.mrb[0].mxu0
        %v1014 = vadd.f32 0.0, %v1013
        %1015 = vmatprep.mubr.f32.mxu0 0.0
        %1016 = vmatmul.mubr.f32.gmra.mrb[0].mxu0 %v871
        %v1017 = vpop.f32.mrb[0].mxu0
        %v1018 = vadd.f32 0.0, %v1017
        %v1019 = vpop.f32.mrb[0].mxu0
        %v1020 = vadd.f32 0.0, %v1019
        %1021 = vmatprep.mubr.f32.mxu0 0.0
        %1022 = vmatmul.mubr.f32.gmra.mrb[0].mxu0 %v874
        %v1023 = vpop.f32.mrb[0].mxu0
        %v1024 = vadd.f32 0.0, %v1023
        %v1025 = vpop.f32.mrb[0].mxu0
        %v1026 = vadd.f32 0.0, %v1025
        %1027 = vmatprep.mubr.f32.mxu0 0.0
        %1028 = vmatmul.mubr.f32.gmra.mrb[0].mxu0 %v877
        %v1029 = vpop.f32.mrb[0].mxu0
        %v1030 = vadd.f32 0.0, %v1029
        %v1031 = vpop.f32.mrb[0].mxu0
        %v1032 = vadd.f32 0.0, %v1031
        %1033 = vmatprep.mubr.f32.mxu0 0.0
        %1034 = vmatmul.mubr.f32.gmra.mrb[0].mxu0 %v880
        %v1035 = vpop.f32.mrb[0].mxu0
        %v1036 = vadd.f32 0.0, %v1035
        %v1037 = vpop.f32.mrb[0].mxu0
        %v1038 = vadd.f32 0.0, %v1037
        %1039 = vmatprep.mubr.f32.mxu0 0.0
        %1040 = vmatmul.mubr.f32.gmra.mrb[0].mxu0 %v883
        %v1041 = vpop.f32.mrb[0].mxu0
        %v1042 = vadd.f32 0.0, %v1041
        %v1043 = vpop.f32.mrb[0].mxu0
        %v1044 = vadd.f32 0.0, %v1043
        %1045 = vdwg.mxu0
        %v1046 = vmul.f32 %v952, 0.17677669
        %v1047 = vmul.f32 %v954, 0.17677669
        %v1048 = vmul.f32 %v958, 0.17677669
        %v1049 = vmul.f32 %v960, 0.17677669
        %v1050 = vmul.f32 %v964, 0.17677669
        %v1051 = vmul.f32 %v966, 0.17677669
        %v1052 = vmul.f32 %v970, 0.17677669
        %v1053 = vmul.f32 %v972, 0.17677669
        %v1054 = vmul.f32 %v976, 0.17677669
        %v1055 = vmul.f32 %v978, 0.17677669
        %v1056 = vmul.f32 %v982, 0.17677669
        %v1057 = vmul.f32 %v984, 0.17677669
        %v1058 = vmul.f32 %v988, 0.17677669
        %v1059 = vmul.f32 %v990, 0.17677669
        %v1060 = vmul.f32 %v994, 0.17677669
        %v1061 = vmul.f32 %v996, 0.17677669
        %v1062 = vmul.f32 %v1000, 0.17677669
        %v1063 = vmul.f32 %v1002, 0.17677669
        %v1064 = vmul.f32 %v1006, 0.17677669
        %v1065 = vmul.f32 %v1008, 0.17677669
        %v1066 = vmul.f32 %v1012, 0.17677669
        %v1067 = vmul.f32 %v1014, 0.17677669
        %v1068 = vmul.f32 %v1018, 0.17677669
        %v1069 = vmul.f32 %v1020, 0.17677669
        %v1070 = vmul.f32 %v1024, 0.17677669
        %v1071 = vmul.f32 %v1026, 0.17677669
        %v1072 = vmul.f32 %v1030, 0.17677669
        %v1073 = vmul.f32 %v1032, 0.17677669
        %v1074 = vmul.f32 %v1036, 0.17677669
        %v1075 = vmul.f32 %v1038, 0.17677669
        %v1076 = vmul.f32 %v1042, 0.17677669
        %v1077 = vmul.f32 %v1044, 0.17677669
        %v1078 = vmax.f32 %v1046, %v1047
        %1079 = vmax.xlane.f32.xlu0 %v1078
        %v1080 = vpop.xlane.xlu0 %1079
        %v1081 = vmax.f32 %v1048, %v1049
        %1082 = vmax.xlane.f32.xlu0 %v1081
        %v1083 = vpop.xlane.xlu0 %1082
        %v1084 = vmax.f32 %v1050, %v1051
        %1085 = vmax.xlane.f32.xlu0 %v1084
        %v1086 = vpop.xlane.xlu0 %1085
        %v1087 = vmax.f32 %v1052, %v1053
        %1088 = vmax.xlane.f32.xlu0 %v1087
        %v1089 = vpop.xlane.xlu0 %1088
        %v1090 = vmax.f32 %v1054, %v1055
        %1091 = vmax.xlane.f32.xlu0 %v1090
        %v1092 = vpop.xlane.xlu0 %1091
        %v1093 = vmax.f32 %v1056, %v1057
        %1094 = vmax.xlane.f32.xlu0 %v1093
        %v1095 = vpop.xlane.xlu0 %1094
        %v1096 = vmax.f32 %v1058, %v1059
        %1097 = vmax.xlane.f32.xlu0 %v1096
        %v1098 = vpop.xlane.xlu0 %1097
        %v1099 = vmax.f32 %v1060, %v1061
        %1100 = vmax.xlane.f32.xlu0 %v1099
        %v1101 = vpop.xlane.xlu0 %1100
        %v1102 = vmax.f32 %v1062, %v1063
        %1103 = vmax.xlane.f32.xlu0 %v1102
        %v1104 = vpop.xlane.xlu0 %1103
        %v1105 = vmax.f32 %v1064, %v1065
        %1106 = vmax.xlane.f32.xlu0 %v1105
        %v1107 = vpop.xlane.xlu0 %1106
        %v1108 = vmax.f32 %v1066, %v1067
        %1109 = vmax.xlane.f32.xlu0 %v1108
        %v1110 = vpop.xlane.xlu0 %1109
        %v1111 = vmax.f32 %v1068, %v1069
        %1112 = vmax.xlane.f32.xlu0 %v1111
        %v1113 = vpop.xlane.xlu0 %1112
        %v1114 = vmax.f32 %v1070, %v1071
        %1115 = vmax.xlane.f32.xlu0 %v1114
        %v1116 = vpop.xlane.xlu0 %1115
        %v1117 = vmax.f32 %v1072, %v1073
        %1118 = vmax.xlane.f32.xlu0 %v1117
        %v1119 = vpop.xlane.xlu0 %1118
        %v1120 = vmax.f32 %v1074, %v1075
        %1121 = vmax.xlane.f32.xlu0 %v1120
        %v1122 = vpop.xlane.xlu0 %1121
        %v1123 = vmax.f32 %v1076, %v1077
        %1124 = vmax.xlane.f32.xlu0 %v1123
        %v1125 = vpop.xlane.xlu0 %1124
        %v1126 = vsub.f32 %v1046, %v1080
        %v1127 = vsub.f32 %v1047, %v1080
        %v1128 = vsub.f32 %v1048, %v1083
        %v1129 = vsub.f32 %v1049, %v1083
        %v1130 = vsub.f32 %v1050, %v1086
        %v1131 = vsub.f32 %v1051, %v1086
        %v1132 = vsub.f32 %v1052, %v1089
        %v1133 = vsub.f32 %v1053, %v1089
        %v1134 = vsub.f32 %v1054, %v1092
        %v1135 = vsub.f32 %v1055, %v1092
        %v1136 = vsub.f32 %v1056, %v1095
        %v1137 = vsub.f32 %v1057, %v1095
        %v1138 = vsub.f32 %v1058, %v1098
        %v1139 = vsub.f32 %v1059, %v1098
        %v1140 = vsub.f32 %v1060, %v1101
        %v1141 = vsub.f32 %v1061, %v1101
        %v1142 = vsub.f32 %v1062, %v1104
        %v1143 = vsub.f32 %v1063, %v1104
        %v1144 = vsub.f32 %v1064, %v1107
        %v1145 = vsub.f32 %v1065, %v1107
        %v1146 = vsub.f32 %v1066, %v1110
        %v1147 = vsub.f32 %v1067, %v1110
        %v1148 = vsub.f32 %v1068, %v1113
        %v1149 = vsub.f32 %v1069, %v1113
        %v1150 = vsub.f32 %v1070, %v1116
        %v1151 = vsub.f32 %v1071, %v1116
        %v1152 = vsub.f32 %v1072, %v1119
        %v1153 = vsub.f32 %v1073, %v1119
        %v1154 = vsub.f32 %v1074, %v1122
        %v1155 = vsub.f32 %v1075, %v1122
        %v1156 = vsub.f32 %v1076, %v1125
        %v1157 = vsub.f32 %v1077, %v1125
        %v1158 = vmul.f32 %v1126, 1.442695
        %v1159 = vpow.pop %v1158
        %v1160 = vmul.f32 %v1127, 1.442695
        %v1161 = vpow.pop %v1160
        %v1162 = vmul.f32 %v1128, 1.442695
        %v1163 = vpow.pop %v1162
        %v1164 = vmul.f32 %v1129, 1.442695
        %v1165 = vpow.pop %v1164
        %v1166 = vmul.f32 %v1130, 1.442695
        %v1167 = vpow.pop %v1166
        %v1168 = vmul.f32 %v1131, 1.442695
        %v1169 = vpow.pop %v1168
        %v1170 = vmul.f32 %v1132, 1.442695
        %v1171 = vpow.pop %v1170
        %v1172 = vmul.f32 %v1133, 1.442695
        %v1173 = vpow.pop %v1172
        %v1174 = vmul.f32 %v1134, 1.442695
        %v1175 = vpow.pop %v1174
        %v1176 = vmul.f32 %v1135, 1.442695
        %v1177 = vpow.pop %v1176
        %v1178 = vmul.f32 %v1136, 1.442695
        %v1179 = vpow.pop %v1178
        %v1180 = vmul.f32 %v1137, 1.442695
        %v1181 = vpow.pop %v1180
        %v1182 = vmul.f32 %v1138, 1.442695
        %v1183 = vpow.pop %v1182
        %v1184 = vmul.f32 %v1139, 1.442695
        %v1185 = vpow.pop %v1184
        %v1186 = vmul.f32 %v1140, 1.442695
        %v1187 = vpow.pop %v1186
        %v1188 = vmul.f32 %v1141, 1.442695
        %v1189 = vpow.pop %v1188
        %v1190 = vmul.f32 %v1142, 1.442695
        %v1191 = vpow.pop %v1190
        %v1192 = vmul.f32 %v1143, 1.442695
        %v1193 = vpow.pop %v1192
        %v1194 = vmul.f32 %v1144, 1.442695
        %v1195 = vpow.pop %v1194
        %v1196 = vmul.f32 %v1145, 1.442695
        %v1197 = vpow.pop %v1196
        %v1198 = vmul.f32 %v1146, 1.442695
        %v1199 = vpow.pop %v1198
        %v1200 = vmul.f32 %v1147, 1.442695
        %v1201 = vpow.pop %v1200
        %v1202 = vmul.f32 %v1148, 1.442695
        %v1203 = vpow.pop %v1202
        %v1204 = vmul.f32 %v1149, 1.442695
        %v1205 = vpow.pop %v1204
        %v1206 = vmul.f32 %v1150, 1.442695
        %v1207 = vpow.pop %v1206
        %v1208 = vmul.f32 %v1151, 1.442695
        %v1209 = vpow.pop %v1208
        %v1210 = vmul.f32 %v1152, 1.442695
        %v1211 = vpow.pop %v1210
        %v1212 = vmul.f32 %v1153, 1.442695
        %v1213 = vpow.pop %v1212
        %v1214 = vmul.f32 %v1154, 1.442695
        %v1215 = vpow.pop %v1214
        %v1216 = vmul.f32 %v1155, 1.442695
        %v1217 = vpow.pop %v1216
        %v1218 = vmul.f32 %v1156, 1.442695
        %v1219 = vpow.pop %v1218
        %v1220 = vmul.f32 %v1157, 1.442695
        %v1221 = vpow.pop %v1220
        %v1222 = vadd.f32 %v1159, %v1161
        %1223 = vadd.xlane.f32.xlu0 %v1222
        %v1224 = vpop.xlane.xlu0 %1223
        %v1225 = vadd.f32 %v1163, %v1165
        %1226 = vadd.xlane.f32.xlu0 %v1225
        %v1227 = vpop.xlane.xlu0 %1226
        %v1228 = vadd.f32 %v1167, %v1169
        %1229 = vadd.xlane.f32.xlu0 %v1228
        %v1230 = vpop.xlane.xlu0 %1229
        %v1231 = vadd.f32 %v1171, %v1173
        %1232 = vadd.xlane.f32.xlu0 %v1231
        %v1233 = vpop.xlane.xlu0 %1232
        %v1234 = vadd.f32 %v1175, %v1177
        %1235 = vadd.xlane.f32.xlu0 %v1234
        %v1236 = vpop.xlane.xlu0 %1235
        %v1237 = vadd.f32 %v1179, %v1181
        %1238 = vadd.xlane.f32.xlu0 %v1237
        %v1239 = vpop.xlane.xlu0 %1238
        %v1240 = vadd.f32 %v1183, %v1185
        %1241 = vadd.xlane.f32.xlu0 %v1240
        %v1242 = vpop.xlane.xlu0 %1241
        %v1243 = vadd.f32 %v1187, %v1189
        %1244 = vadd.xlane.f32.xlu0 %v1243
        %v1245 = vpop.xlane.xlu0 %1244
        %v1246 = vadd.f32 %v1191, %v1193
        %1247 = vadd.xlane.f32.xlu0 %v1246
        %v1248 = vpop.xlane.xlu0 %1247
        %v1249 = vadd.f32 %v1195, %v1197
        %1250 = vadd.xlane.f32.xlu0 %v1249
        %v1251 = vpop.xlane.xlu0 %1250
        %v1252 = vadd.f32 %v1199, %v1201
        %1253 = vadd.xlane.f32.xlu0 %v1252
        %v1254 = vpop.xlane.xlu0 %1253
        %v1255 = vadd.f32 %v1203, %v1205
        %1256 = vadd.xlane.f32.xlu0 %v1255
        %v1257 = vpop.xlane.xlu0 %1256
        %v1258 = vadd.f32 %v1207, %v1209
        %1259 = vadd.xlane.f32.xlu0 %v1258
        %v1260 = vpop.xlane.xlu0 %1259
        %v1261 = vadd.f32 %v1211, %v1213
        %1262 = vadd.xlane.f32.xlu0 %v1261
        %v1263 = vpop.xlane.xlu0 %1262
        %v1264 = vadd.f32 %v1215, %v1217
        %1265 = vadd.xlane.f32.xlu0 %v1264
        %v1266 = vpop.xlane.xlu0 %1265
        %v1267 = vadd.f32 %v1219, %v1221
        %1268 = vadd.xlane.f32.xlu0 %v1267
        %v1269 = vpop.xlane.xlu0 %1268
        %v1270 = vrcp.pop %v1224
        %v1271 = vmul.f32 %v1159, %v1270
        %v1272 = vmul.f32 %v1161, %v1270
        %v1273 = vrcp.pop %v1227
        %v1274 = vmul.f32 %v1163, %v1273
        %v1275 = vmul.f32 %v1165, %v1273
        %v1276 = vrcp.pop %v1230
        %v1277 = vmul.f32 %v1167, %v1276
        %v1278 = vmul.f32 %v1169, %v1276
        %v1279 = vrcp.pop %v1233
        %v1280 = vmul.f32 %v1171, %v1279
        %v1281 = vmul.f32 %v1173, %v1279
        %v1282 = vrcp.pop %v1236
        %v1283 = vmul.f32 %v1175, %v1282
        %v1284 = vmul.f32 %v1177, %v1282
        %v1285 = vrcp.pop %v1239
        %v1286 = vmul.f32 %v1179, %v1285
        %v1287 = vmul.f32 %v1181, %v1285
        %v1288 = vrcp.pop %v1242
        %v1289 = vmul.f32 %v1183, %v1288
        %v1290 = vmul.f32 %v1185, %v1288
        %v1291 = vrcp.pop %v1245
        %v1292 = vmul.f32 %v1187, %v1291
        %v1293 = vmul.f32 %v1189, %v1291
        %v1294 = vrcp.pop %v1248
        %v1295 = vmul.f32 %v1191, %v1294
        %v1296 = vmul.f32 %v1193, %v1294
        %v1297 = vrcp.pop %v1251
        %v1298 = vmul.f32 %v1195, %v1297
        %v1299 = vmul.f32 %v1197, %v1297
        %v1300 = vrcp.pop %v1254
        %v1301 = vmul.f32 %v1199, %v1300
        %v1302 = vmul.f32 %v1201, %v1300
        %v1303 = vrcp.pop %v1257
        %v1304 = vmul.f32 %v1203, %v1303
        %v1305 = vmul.f32 %v1205, %v1303
        %v1306 = vrcp.pop %v1260
        %v1307 = vmul.f32 %v1207, %v1306
        %v1308 = vmul.f32 %v1209, %v1306
        %v1309 = vrcp.pop %v1263
        %v1310 = vmul.f32 %v1211, %v1309
        %v1311 = vmul.f32 %v1213, %v1309
        %v1312 = vrcp.pop %v1266
        %v1313 = vmul.f32 %v1215, %v1312
        %v1314 = vmul.f32 %v1217, %v1312
        %v1315 = vrcp.pop %v1269
        %v1316 = vmul.f32 %v1219, %v1315
        %v1317 = vmul.f32 %v1221, %v1315
        %v1318 = vld [vmem:[#allocation3] sm:$0xff]
        %v1319 = vld [vmem:[#allocation3 + $0x8] sm:$0xff]
        %v1320 = vld [vmem:[#allocation3 + $0x10] sm:$0xff]
        %v1321 = vld [vmem:[#allocation3 + $0x18] sm:$0xff]
        %v1322 = vld [vmem:[#allocation3 + $0x20] sm:$0xff]
        %v1323 = vld [vmem:[#allocation3 + $0x28] sm:$0xff]
        %v1324 = vld [vmem:[#allocation3 + $0x30] sm:$0xff]
        %v1325 = vld [vmem:[#allocation3 + $0x38] sm:$0xff]
        %v1326 = vld [vmem:[#allocation3 + $0x40] sm:$0xff]
        %v1327 = vld [vmem:[#allocation3 + $0x48] sm:$0xff]
        %v1328 = vld [vmem:[#allocation3 + $0x50] sm:$0xff]
        %v1329 = vld [vmem:[#allocation3 + $0x58] sm:$0xff]
        %v1330 = vld [vmem:[#allocation3 + $0x60] sm:$0xff]
        %v1331 = vld [vmem:[#allocation3 + $0x68] sm:$0xff]
        %v1332 = vld [vmem:[#allocation3 + $0x70] sm:$0xff]
        %v1333 = vld [vmem:[#allocation3 + $0x78] sm:$0xff]
        %v1334 = vld [vmem:[#allocation3 + $0x80] sm:$0xff]
        %v1335 = vld [vmem:[#allocation3 + $0x88] sm:$0xff]
        %v1336 = vld [vmem:[#allocation3 + $0x90] sm:$0xff]
        %v1337 = vld [vmem:[#allocation3 + $0x98] sm:$0xff]
        %v1338 = vld [vmem:[#allocation3 + $0xa0] sm:$0xff]
        %v1339 = vld [vmem:[#allocation3 + $0xa8] sm:$0xff]
        %v1340 = vld [vmem:[#allocation3 + $0xb0] sm:$0xff]
        %v1341 = vld [vmem:[#allocation3 + $0xb8] sm:$0xff]
        %v1342 = vld [vmem:[#allocation3 + $0xc0] sm:$0xff]
        %v1343 = vld [vmem:[#allocation3 + $0xc8] sm:$0xff]
        %v1344 = vld [vmem:[#allocation3 + $0xd0] sm:$0xff]
        %v1345 = vld [vmem:[#allocation3 + $0xd8] sm:$0xff]
        %v1346 = vld [vmem:[#allocation3 + $0xe0] sm:$0xff]
        %v1347 = vld [vmem:[#allocation3 + $0xe8] sm:$0xff]
        %v1348 = vld [vmem:[#allocation3 + $0xf0] sm:$0xff]
        %v1349 = vld [vmem:[#allocation3 + $0xf8] sm:$0xff]
        %1350 = vmatprep.subr.mxu0 0.0
        %1351 = vmatpush1.msra.mxu0 %v1318
        %1352 = vmatprep.subr.mxu0 0.0
        %1353 = vmatpush1.msra.mxu0 %v1319
        %1354 = vmatprep.subr.mxu0 0.0
        %1355 = vmatpush1.msra.mxu0 %v1320
        %1356 = vmatprep.subr.mxu0 0.0
        %1357 = vmatpush1.msra.mxu0 %v1321
        %1358 = vmatprep.subr.mxu0 0.0
        %1359 = vmatpush1.msra.mxu0 %v1322
        %1360 = vmatprep.subr.mxu0 0.0
        %1361 = vmatpush1.msra.mxu0 %v1323
        %1362 = vmatprep.subr.mxu0 0.0
        %1363 = vmatpush1.msra.mxu0 %v1324
        %1364 = vmatprep.subr.mxu0 0.0
        %1365 = vmatpush1.msra.mxu0 %v1325
        %1366 = vmatprep.subr.mxu0 0.0
        %1367 = vmatpush1.msra.mxu0 %v1326
        %1368 = vmatprep.subr.mxu0 0.0
        %1369 = vmatpush1.msra.mxu0 %v1327
        %1370 = vmatprep.subr.mxu0 0.0
        %1371 = vmatpush1.msra.mxu0 %v1328
        %1372 = vmatprep.subr.mxu0 0.0
        %1373 = vmatpush1.msra.mxu0 %v1329
        %1374 = vmatprep.subr.mxu0 0.0
        %1375 = vmatpush1.msra.mxu0 %v1330
        %1376 = vmatprep.subr.mxu0 0.0
        %1377 = vmatpush1.msra.mxu0 %v1331
        %1378 = vmatprep.subr.mxu0 0.0
        %1379 = vmatpush1.msra.mxu0 %v1332
        %1380 = vmatprep.subr.mxu0 0.0
        %1381 = vmatpush1.msra.mxu0 %v1333
        %1382 = vmatprep.subr.mxu0 0.0
        %1383 = vmatpush1.msra.mxu0 %v1334
        %1384 = vmatprep.subr.mxu0 0.0
        %1385 = vmatpush1.msra.mxu0 %v1335
        %1386 = vmatprep.subr.mxu0 0.0
        %1387 = vmatpush1.msra.mxu0 %v1336
        %1388 = vmatprep.subr.mxu0 0.0
        %1389 = vmatpush1.msra.mxu0 %v1337
        %1390 = vmatprep.subr.mxu0 0.0
        %1391 = vmatpush1.msra.mxu0 %v1338
        %1392 = vmatprep.subr.mxu0 0.0
        %1393 = vmatpush1.msra.mxu0 %v1339
        %1394 = vmatprep.subr.mxu0 0.0
        %1395 = vmatpush1.msra.mxu0 %v1340
        %1396 = vmatprep.subr.mxu0 0.0
        %1397 = vmatpush1.msra.mxu0 %v1341
        %1398 = vmatprep.subr.mxu0 0.0
        %1399 = vmatpush1.msra.mxu0 %v1342
        %1400 = vmatprep.subr.mxu0 0.0
        %1401 = vmatpush1.msra.mxu0 %v1343
        %1402 = vmatprep.subr.mxu0 0.0
        %1403 = vmatpush1.msra.mxu0 %v1344
        %1404 = vmatprep.subr.mxu0 0.0
        %1405 = vmatpush1.msra.mxu0 %v1345
        %1406 = vmatprep.subr.mxu0 0.0
        %1407 = vmatpush1.msra.mxu0 %v1346
        %1408 = vmatprep.subr.mxu0 0.0
        %1409 = vmatpush1.msra.mxu0 %v1347
        %1410 = vmatprep.subr.mxu0 0.0
        %1411 = vmatpush1.msra.mxu0 %v1348
        %1412 = vmatprep.subr.mxu0 0.0
        %1413 = vmatpush1.msra.mxu0 %v1349
        %1414 = vmatprep.mubr.f32.mxu0 %v1272
        %1415 = vmatmul.mubr.f32.gmra.mrb[0].mxu0 %v1271
        %v1416 = vpop.f32.mrb[0].mxu0
        %v1417 = vadd.f32 0.0, %v1416
        %v1418 = vpop.f32.mrb[0].mxu0
        %1419 = vmatprep.mubr.f32.mxu0 %v1275
        %1420 = vmatmul.mubr.f32.gmra.mrb[0].mxu0 %v1274
        %v1421 = vpop.f32.mrb[0].mxu0
        %v1422 = vadd.f32 0.0, %v1421
        %v1423 = vpop.f32.mrb[0].mxu0
        %1424 = vmatprep.mubr.f32.mxu0 %v1278
        %1425 = vmatmul.mubr.f32.gmra.mrb[0].mxu0 %v1277
        %v1426 = vpop.f32.mrb[0].mxu0
        %v1427 = vadd.f32 0.0, %v1426
        %v1428 = vpop.f32.mrb[0].mxu0
        %1429 = vmatprep.mubr.f32.mxu0 %v1281
        %1430 = vmatmul.mubr.f32.gmra.mrb[0].mxu0 %v1280
        %v1431 = vpop.f32.mrb[0].mxu0
        %v1432 = vadd.f32 0.0, %v1431
        %v1433 = vpop.f32.mrb[0].mxu0
        %1434 = vmatprep.mubr.f32.mxu0 %v1284
        %1435 = vmatmul.mubr.f32.gmra.mrb[0].mxu0 %v1283
        %v1436 = vpop.f32.mrb[0].mxu0
        %v1437 = vadd.f32 0.0, %v1436
        %v1438 = vpop.f32.mrb[0].mxu0
        %1439 = vmatprep.mubr.f32.mxu0 %v1287
        %1440 = vmatmul.mubr.f32.gmra.mrb[0].mxu0 %v1286
        %v1441 = vpop.f32.mrb[0].mxu0
        %v1442 = vadd.f32 0.0, %v1441
        %v1443 = vpop.f32.mrb[0].mxu0
        %1444 = vmatprep.mubr.f32.mxu0 %v1290
        %1445 = vmatmul.mubr.f32.gmra.mrb[0].mxu0 %v1289
        %v1446 = vpop.f32.mrb[0].mxu0
        %v1447 = vadd.f32 0.0, %v1446
        %v1448 = vpop.f32.mrb[0].mxu0
        %1449 = vmatprep.mubr.f32.mxu0 %v1293
        %1450 = vmatmul.mubr.f32.gmra.mrb[0].mxu0 %v1292
        %v1451 = vpop.f32.mrb[0].mxu0
        %v1452 = vadd.f32 0.0, %v1451
        %v1453 = vpop.f32.mrb[0].mxu0
        %1454 = vmatprep.mubr.f32.mxu0 %v1296
        %1455 = vmatmul.mubr.f32.gmra.mrb[0].mxu0 %v1295
        %v1456 = vpop.f32.mrb[0].mxu0
        %v1457 = vadd.f32 0.0, %v1456
        %v1458 = vpop.f32.mrb[0].mxu0
        %1459 = vmatprep.mubr.f32.mxu0 %v1299
        %1460 = vmatmul.mubr.f32.gmra.mrb[0].mxu0 %v1298
        %v1461 = vpop.f32.mrb[0].mxu0
        %v1462 = vadd.f32 0.0, %v1461
        %v1463 = vpop.f32.mrb[0].mxu0
        %1464 = vmatprep.mubr.f32.mxu0 %v1302
        %1465 = vmatmul.mubr.f32.gmra.mrb[0].mxu0 %v1301
        %v1466 = vpop.f32.mrb[0].mxu0
        %v1467 = vadd.f32 0.0, %v1466
        %v1468 = vpop.f32.mrb[0].mxu0
        %1469 = vmatprep.mubr.f32.mxu0 %v1305
        %1470 = vmatmul.mubr.f32.gmra.mrb[0].mxu0 %v1304
        %v1471 = vpop.f32.mrb[0].mxu0
        %v1472 = vadd.f32 0.0, %v1471
        %v1473 = vpop.f32.mrb[0].mxu0
        %1474 = vmatprep.mubr.f32.mxu0 %v1308
        %1475 = vmatmul.mubr.f32.gmra.mrb[0].mxu0 %v1307
        %v1476 = vpop.f32.mrb[0].mxu0
        %v1477 = vadd.f32 0.0, %v1476
        %v1478 = vpop.f32.mrb[0].mxu0
        %1479 = vmatprep.mubr.f32.mxu0 %v1311
        %1480 = vmatmul.mubr.f32.gmra.mrb[0].mxu0 %v1310
        %v1481 = vpop.f32.mrb[0].mxu0
        %v1482 = vadd.f32 0.0, %v1481
        %v1483 = vpop.f32.mrb[0].mxu0
        %1484 = vmatprep.mubr.f32.mxu0 %v1314
        %1485 = vmatmul.mubr.f32.gmra.mrb[0].mxu0 %v1313
        %v1486 = vpop.f32.mrb[0].mxu0
        %v1487 = vadd.f32 0.0, %v1486
        %v1488 = vpop.f32.mrb[0].mxu0
        %1489 = vmatprep.mubr.f32.mxu0 %v1317
        %1490 = vmatmul.mubr.f32.gmra.mrb[0].mxu0 %v1316
        %v1491 = vpop.f32.mrb[0].mxu0
        %v1492 = vadd.f32 0.0, %v1491
        %v1493 = vpop.f32.mrb[0].mxu0
        %1494 = vdwg.mxu0
        %1495 = vxpose.xlu0.b32.start [1/16] %v1417, 128
        %1496 = vxpose.xlu0.b32.cont [2/16] %v1422, 128
        %1497 = vxpose.xlu0.b32.cont [3/16] %v1427, 128
        %1498 = vxpose.xlu0.b32.cont [4/16] %v1432, 128
        %1499 = vxpose.xlu0.b32.cont [5/16] %v1437, 128
        %1500 = vxpose.xlu0.b32.cont [6/16] %v1442, 128
        %1501 = vxpose.xlu0.b32.cont [7/16] %v1447, 128
        %1502 = vxpose.xlu0.b32.cont [8/16] %v1452, 128
        %1503 = vxpose.xlu0.b32.cont [9/16] %v1457, 128
        %1504 = vxpose.xlu0.b32.cont [10/16] %v1462, 128
        %1505 = vxpose.xlu0.b32.cont [11/16] %v1467, 128
        %1506 = vxpose.xlu0.b32.cont [12/16] %v1472, 128
        %1507 = vxpose.xlu0.b32.cont [13/16] %v1477, 128
        %1508 = vxpose.xlu0.b32.cont [14/16] %v1482, 128
        %1509 = vxpose.xlu0.b32.cont [15/16] %v1487, 128
        %1510 = vxpose.xlu0.b32.end [16/16] %v1492, 128
        %v1511 = vpop.trf.xlu0
        %v1512 = vpop.trf.xlu0
        %v1513 = vpop.trf.xlu0
        %v1514 = vpop.trf.xlu0
        %v1515 = vpop.trf.xlu0
        %v1516 = vpop.trf.xlu0
        %v1517 = vpop.trf.xlu0
        %v1518 = vpop.trf.xlu0
        %v1519 = vpop.trf.xlu0
        %v1520 = vpop.trf.xlu0
        %v1521 = vpop.trf.xlu0
        %v1522 = vpop.trf.xlu0
        %v1523 = vpop.trf.xlu0
        %v1524 = vpop.trf.xlu0
        %v1525 = vpop.trf.xlu0
        %v1526 = vpop.trf.xlu0
        %1527 = vst [vmem:[%s281] sm:$0xff] %v1511
        %1528 = vst [vmem:[%s281 + $0x8] sm:$0xff] %v1512
        %1529 = vst [vmem:[%s281 + $0x10] sm:$0xff] %v1513
        %1530 = vst [vmem:[%s281 + $0x18] sm:$0xff] %v1514
        %s1531 = sand.u32 %s192, 1
        %s1532 = sand.u32 %s192, 1
        %s1533 = smul.addr %s1532, 32
        %s1534 = scalar_lea.vmem [#allocation4], %s1533
        // Predicated region
        $region53: #{attention_layer.1} parent=47 // pred_check
          %p1535 = pneg %p202
        $region54: #{attention_layer.1} parent=47 // pred_check_branch
          %1537 = sbr.rel (%p1535) target = $region56
        $region55: #{attention_layer.1} parent=47 // pred_region
          %s1538 = smul.addr %s22, 8
          %s1539 = sadd.s32 %s23, %s1538
          %s1540 = smul.addr %s1539, 8
          %s1541 = scalar_lea.vmem %s7, %s1540
          // Predicated region
          $region57: #{attention_layer.1} parent=55 // pred_check
            _
          $region58: #{attention_layer.1} parent=55 // pred_check_branch
            %1543 = sbr.rel (0) target = $region60
          $region59: #{attention_layer.1} parent=55 // pred_region
            // Predicated region
            $region61: #{attention_layer.1} parent=59 // pred_check
              _
            $region62: #{attention_layer.1} parent=59 // pred_check_branch
              %1545 = sbr.rel (0) target = $region64
            $region63: #{attention_layer.1} parent=59 // pred_region
              // Predicated region
              $region76: #{attention_layer.1} parent=63 // pred_check
                _
              $region77: #{attention_layer.1} parent=63 // pred_check_branch
                %1566 = sbr.rel (0) target = $region79
              $region78: #{attention_layer.1} parent=63 // pred_region
                loop: start=0, step=1, limit=1
                $region80: #{attention_layer.1} parent=78 // loop_pre_header
                  _
                $region81: #{attention_layer.1} parent=78 // loop_header
                  %s1568 = sphi 0, %s1572
                  %p1569 = scmp.ge.s32.totalorder %s1568, 1
                  %s1573 = sphi %s1534, %s1534
                  %s1574 = sphi %s1541, %s1541
                $region82: #{attention_layer.1} parent=78 // loop_header_branch
                  %1571 = sbr.rel (%p1569) target = $region86
                $region83: #{attention_layer.1} parent=78 // loop_body
                  %v1575 = vld [vmem:[%s1573] sm:$0xff]
                  %1576 = vst [vmem:[%s1574] sm:$0xff] %v1575
                  %v1577 = vld [vmem:[%s1573 + $0x8] sm:$0xff]
                  %1578 = vst [vmem:[%s1574 + $0x10] sm:$0xff] %v1577
                  %v1579 = vld [vmem:[%s1573 + $0x10] sm:$0xff]
                  %1580 = vst [vmem:[%s1574 + $0x20] sm:$0xff] %v1579
                  %v1581 = vld [vmem:[%s1573 + $0x18] sm:$0xff]
                  %1582 = vst [vmem:[%s1574 + $0x30] sm:$0xff] %v1581
                $region84: #{attention_layer.1} parent=78 // loop_footer
                  %s1572 = sadd.s32 1, %s1568
                $region85: #{attention_layer.1} parent=78 // loop_footer_branch
                  %1567 = sbr.rel target = $region81
                $region86: #{attention_layer.1} parent=78 // loop_exit
                  _
              $region79: #{attention_layer.1} parent=63 // pred_fallthru
                _
              // Predicated region
              $region87: #{attention_layer.1} parent=63 // pred_check
                _
              $region88: #{attention_layer.1} parent=63 // pred_check_branch
                %1584 = sbr.rel target = $region90
              $region89: #{attention_layer.1} parent=63 // pred_region
                _
              $region90: #{attention_layer.1} parent=63 // pred_fallthru
                _
            $region64: #{attention_layer.1} parent=59 // pred_fallthru
              _
            // Predicated region
            $region65: #{attention_layer.1} parent=59 // pred_check
              _
            $region66: #{attention_layer.1} parent=59 // pred_check_branch
              %1547 = sbr.rel target = $region68
            $region67: #{attention_layer.1} parent=59 // pred_region
              loop: start=0, step=1, limit=1
              $region69: #{attention_layer.1} parent=67 // loop_pre_header
                _
              $region70: #{attention_layer.1} parent=67 // loop_header
                %s1550 = sphi 0, %s1554
                %p1551 = scmp.ge.s32.totalorder %s1550, 1
                %s1555 = sphi %s1534, %s1534
                %s1556 = sphi %s1541, %s1541
              $region71: #{attention_layer.1} parent=67 // loop_header_branch
                %1553 = sbr.rel (%p1551) target = $region75
              $region72: #{attention_layer.1} parent=67 // loop_body
                %v1557 = vld [vmem:[%s1555] sm:$0xff]
                %1558 = vst [vmem:[%s1556] sm:$0xff] %v1557
                %v1559 = vld [vmem:[%s1555 + $0x8] sm:$0xff]
                %1560 = vst [vmem:[%s1556 + $0x10] sm:$0xff] %v1559
                %v1561 = vld [vmem:[%s1555 + $0x10] sm:$0xff]
                %1562 = vst [vmem:[%s1556 + $0x20] sm:$0xff] %v1561
                %v1563 = vld [vmem:[%s1555 + $0x18] sm:$0xff]
                %1564 = vst [vmem:[%s1556 + $0x30] sm:$0xff] %v1563
              $region73: #{attention_layer.1} parent=67 // loop_footer
                %s1554 = sadd.s32 1, %s1550
              $region74: #{attention_layer.1} parent=67 // loop_footer_branch
                %1549 = sbr.rel target = $region70
              $region75: #{attention_layer.1} parent=67 // loop_exit
                _
            $region68: #{attention_layer.1} parent=59 // pred_fallthru
              _
          $region60: #{attention_layer.1} parent=55 // pred_fallthru
            _
          %1585 = vnop
        $region56: #{attention_layer.1} parent=47 // pred_fallthru
          _
      $region48: #{attention_layer.1} parent=5 // pred_fallthru
        _
      %p1586 = scmp.le.s32.totalorder 2, %s13
      // Predicated region
      $region91: #{attention_layer.1} parent=5 // pred_check
        %p1587 = pneg %p1586
      $region92: #{attention_layer.1} parent=5 // pred_check_branch
        %1589 = sbr.rel (%p1587) target = $region94
      $region93: #{attention_layer.1} parent=5 // pred_region
        %s1590 = ssub.s32 %s13, 2
        // Predicated region
        $region95: #{attention_layer.1} parent=93 // pred_check
          %p1591 = pneg %p208
        $region96: #{attention_layer.1} parent=93 // pred_check_branch
          %1593 = sbr.rel (%p1591) target = $region98
        $region97: #{attention_layer.1} parent=93 // pred_region
          %s1594 = sand.u32 %s193, 1
          %s1595 = sand.u32 %s193, 1
          %s1596 = smul.addr %s1595, 32
          %s1597 = scalar_lea.vmem [#allocation4], %s1596
        $region98: #{attention_layer.1} parent=93 // pred_fallthru
          _
      $region94: #{attention_layer.1} parent=5 // pred_fallthru
        _
    $region6: #{attention_layer.1} parent=1 // loop_footer
      %s17 = sadd.s32 1, %s13
    $region7: #{attention_layer.1} parent=1 // loop_footer_branch
      %12 = sbr.rel target = $region3
    $region8: #{attention_layer.1} parent=1 // loop_exit
      _

</llo_original>
